<compile_context>
chip_gen: v5e
topology: v5e:2x2
jax: 0.10.0
libtpu: 0.0.40
codegen_flags: <defaults>
</compile_context>

<pallas_src>
import functools

import jax
import jax.numpy as jnp
from jax.experimental import pallas as pl
from jax.experimental.pallas import tpu as pltpu

HIDDEN = 125
NUM_LAYERS = 6
PAD_C = 128        # lane-dense padded channel width for the hidden layers
FMA_CIN_MAX = 32   # first layer runs as VPU FMAs when C_in <= this


def _round_up(x, m):
    return ((x + m - 1) // m) * m


def _mlp_kernel(x_ref, w0_ref, w_ref, b_ref, o_ref, *, fma_first, num_out):
    """One row tile through the full 6-layer pointwise MLP.

    x_ref : (TM, C_in)    f32 (fma_first) or (TM, Kpad) bf16
    w0_ref: (C_in, 128)   f32 (fma_first) or (Kpad, 128) bf16  (layer-0 weight)
    w_ref : (5, 128, 128) bf16   layers 1..5 weights, zero-padded
    b_ref : (6, 1, 128)   f32    all biases, zero-padded
    o_ref : (TM, num_out) f32    true output channels only
    """
    if fma_first:
        # Tiny contracting dim: do layer 0 on the VPU in exact f32.  Avoids a
        # degenerate K<<128 MXU matmul and lets the input stay unpadded in HBM.
        x = x_ref[...]                       # (TM, C_in) f32
        w0 = w0_ref[...]                     # (C_in, 128) f32
        cin = x_ref.shape[-1]
        h = b_ref[0] + x[:, 0:1] * w0[0:1, :]
        for c in range(1, cin):
            h = h + x[:, c:c + 1] * w0[c:c + 1, :]
    else:
        # Wide inputs: regular bf16 MXU matmul with f32 accumulation.
        h = jnp.dot(x_ref[...], w0_ref[...],
                    preferred_element_type=jnp.float32) + b_ref[0]
    h = jnp.maximum(h, 0.0)                  # ReLU after layer 0

    for k in range(NUM_LAYERS - 1):          # layers 1..5
        y = jnp.dot(h.astype(jnp.bfloat16), w_ref[k],
                    preferred_element_type=jnp.float32) + b_ref[k + 1]
        # ReLU on all but the final layer; keep f32 math (v5e VPU has no bf16).
        h = jnp.maximum(y, 0.0) if k < NUM_LAYERS - 2 else y

    # Narrow, exact-width store; padded lanes are sliced off here, not in JAX.
    o_ref[...] = h[:, :num_out].astype(o_ref.dtype)


def _pack_params(params, fma_first):
    """Zero-pad weights/biases to 128 output lanes; stack layers 1..5."""
    w0, b0 = params[0]
    cin, d0 = w0.shape
    assert d0 <= PAD_C, "hidden width must be <= 128"
    if fma_first:
        w0_packed = jnp.zeros((cin, PAD_C), jnp.float32).at[:, :d0].set(w0)
    else:
        kpad = _round_up(cin, PAD_C)
        w0_packed = (jnp.zeros((kpad, PAD_C), jnp.float32)
                     .at[:cin, :d0].set(w0).astype(jnp.bfloat16))

    bs = [jnp.zeros((PAD_C,), jnp.float32).at[:d0].set(b0)]
    ws = []
    for w, b in params[1:]:
        din, dout = w.shape
        assert din <= PAD_C and dout <= PAD_C, "channel widths must be <= 128"
        ws.append(jnp.zeros((PAD_C, PAD_C), jnp.float32).at[:din, :dout].set(w))
        bs.append(jnp.zeros((PAD_C,), jnp.float32).at[:dout].set(b))

    w_packed = jnp.stack(ws).astype(jnp.bfloat16)              # (5, 128, 128)
    b_packed = jnp.stack(bs).reshape(NUM_LAYERS, 1, PAD_C)     # (6, 1, 128) f32
    return w0_packed, w_packed, b_packed


def _pick_tile(rows, tm):
    """Large tiles amortize per-step overhead; keep >=2 grid steps when rows
    allow so both v7x TensorCores get work (megacore grid sharding)."""
    tm = _round_up(max(tm, 16), 16)
    if rows >= 32:
        cap = _round_up(-(-rows // 2), 16)   # ceil(rows/2), 16-aligned
    else:
        cap = _round_up(rows, 16)
    return max(16, min(tm, cap))


def _run_mlp_rows(x_in, w0, w_packed, b_packed, *, tm, num_out, fma_first):
    rows, cin_k = x_in.shape
    grid = (pl.cdiv(rows, tm),)              # partial last block is masked

    flops = 2 * rows * (cin_k * PAD_C + (NUM_LAYERS - 1) * PAD_C * PAD_C)
    bytes_accessed = (x_in.size * x_in.dtype.itemsize      # narrow input read
                      + rows * num_out * 4                 # narrow output write
                      + w0.size * w0.dtype.itemsize
                      + w_packed.size * 2                  # bf16 weights
                      + b_packed.size * 4)                 # f32 biases

    kernel = functools.partial(_mlp_kernel, fma_first=fma_first, num_out=num_out)
    return pl.pallas_call(
        kernel,
        out_shape=jax.ShapeDtypeStruct((rows, num_out), jnp.float32),
        grid_spec=pltpu.PrefetchScalarGridSpec(
            num_scalar_prefetch=0,
            grid=grid,
            in_specs=[
                pl.BlockSpec((tm, cin_k), lambda i: (i, 0)),
                # Resident weights / biases: same (full) block every grid step.
                pl.BlockSpec(w0.shape, lambda i: (0, 0)),
                pl.BlockSpec(w_packed.shape, lambda i: (0, 0, 0)),
                pl.BlockSpec(b_packed.shape, lambda i: (0, 0, 0)),
            ],
            out_specs=pl.BlockSpec((tm, num_out), lambda i: (i, 0)),
        ),
        compiler_params=pltpu.CompilerParams(
            dimension_semantics=("parallel",),
            vmem_limit_bytes=32 * 1024 * 1024),
        cost_estimate=pl.CostEstimate(
            flops=flops, transcendentals=0, bytes_accessed=bytes_accessed),
    )(x_in, w0, w_packed, b_packed)


def fully_connected2_forward(x_nchw, params, *, tm=4096):
    """Forward pass matching FullyConnected2.forward (NCHW in, NCHW out)."""
    n, c, h, w = x_nchw.shape
    num_out = params[-1][0].shape[1]
    assert num_out <= PAD_C
    rows = n * h * w
    fma_first = c <= FMA_CIN_MAX

    # NCHW -> (N*H*W, C): channels last so they map to TPU lanes.
    x_rows = jnp.transpose(x_nchw, (0, 2, 3, 1)).reshape(rows, c)
    if fma_first:
        x_in = x_rows.astype(jnp.float32)            # unpadded channels in HBM
    else:
        kpad = _round_up(c, PAD_C)
        x_in = jnp.pad(x_rows, ((0, 0), (0, kpad - c))).astype(jnp.bfloat16)

    w0, w_packed, b_packed = _pack_params(params, fma_first)
    tm_eff = _pick_tile(rows, tm)

    y_rows = _run_mlp_rows(x_in, w0, w_packed, b_packed,
                           tm=tm_eff, num_out=num_out, fma_first=fma_first)

    y = y_rows.reshape(n, h, w, num_out)
    return jnp.transpose(y, (0, 3, 1, 2))            # back to NCHW


def init_params(key, num_in, num_out=3):
    """Deterministic init of the 6 (1x1 conv == dense) layers.

    Mirrors torch.nn.Conv2d default init (uniform(-1/sqrt(fan_in), 1/sqrt(fan_in)))
    for both weight and bias. Weights stored as (C_in, C_out) for x @ W.
    """
    dims = [num_in, HIDDEN, HIDDEN, HIDDEN, HIDDEN, HIDDEN, num_out]
    params = []
    for i in range(NUM_LAYERS):
        key, kw, kb = jax.random.split(key, 3)
        fan_in = dims[i]
        bound = 1.0 / jnp.sqrt(jnp.float32(fan_in))
        wm = jax.random.uniform(kw, (dims[i], dims[i + 1]),
                                dtype=jnp.float32, minval=-bound, maxval=bound)
        b = jax.random.uniform(kb, (dims[i + 1],),
                               dtype=jnp.float32, minval=-bound, maxval=bound)
        params.append((wm, b))
    return params


def _reference_forward(x_nchw, params):
    """Pure-JAX f32 reference (same math, no Pallas) for a sanity check."""
    n, c, h, w = x_nchw.shape
    hcur = jnp.transpose(x_nchw, (0, 2, 3, 1)).reshape(n * h * w, c)
    for i, (wm, b) in enumerate(params):
        hcur = hcur @ wm + b
        if i < len(params) - 1:
            hcur = jnp.maximum(hcur, 0.0)
    c_out = params[-1][0].shape[1]
    return jnp.transpose(hcur.reshape(n, h, w, c_out), (0, 3, 1, 2))


if __name__ == "__main__":
    key = jax.random.PRNGKey(0)
    k_x, k_p = jax.random.split(key)

    # Small shapes consistent with the module: batch=2, num_in=4, spatial=16.
    N, C_IN, H, W = 2, 4, 16, 16
    NUM_OUT = 3
    x = jax.random.normal(k_x, (N, C_IN, H, W), dtype=jnp.float32)

    params = init_params(k_p, C_IN, NUM_OUT)

    fwd = jax.jit(functools.partial(fully_connected2_forward, tm=4096))
    y = fwd(x, params)
    y = jax.block_until_ready(y)

    # Correctness check against the pure-JAX f32 reference (tolerance relaxed
    # for the bf16 MXU operands in layers 1..5; layer 0 is exact f32).
    y_ref = jax.block_until_ready(_reference_forward(x, params))
    assert y.shape == (N, NUM_OUT, H, W), y.shape
    max_err = float(jnp.max(jnp.abs(y - y_ref)))
    assert max_err < 2e-2, f"max abs error too large: {max_err}"

    print("KERNEL_OK")
</pallas_src>

<mosaic_0001>
module attributes {stable_mosaic.version = 11 : i64} {
  func.func @_mlp_kernel(%arg0: i32, %arg1: memref<256x4xf32, #tpu.memory_space<vmem>>, %arg2: memref<4x128xf32, #tpu.memory_space<vmem>>, %arg3: memref<5x128x128xbf16, #tpu.memory_space<vmem>>, %arg4: memref<6x1x128xf32, #tpu.memory_space<vmem>>, %arg5: memref<256x3xf32, #tpu.memory_space<vmem>>) attributes {dimension_semantics = [#tpu.dimension_semantics<parallel>], iteration_bounds = array<i64: 2>, scalar_prefetch = 0 : i64, scratch_operands = 0 : i64, tpu.core_type = #tpu.core_type<tc>, window_params = [{transform_indices = @transform_0, window_bounds = array<i64: 256, 4>}, {pipeline_mode = #tpu.pipeline_mode<synchronous>, transform_indices = @transform_1, window_bounds = array<i64: 4, 128>}, {pipeline_mode = #tpu.pipeline_mode<synchronous>, transform_indices = @transform_2, window_bounds = array<i64: 5, 128, 128>}, {pipeline_mode = #tpu.pipeline_mode<synchronous>, transform_indices = @transform_3, window_bounds = array<i64: 6, 1, 128>}, {transform_indices = @transform_4, window_bounds = array<i64: 256, 3>}]} {
    %c0 = arith.constant 0 : index
    %c0_0 = arith.constant 0 : index
    %0 = vector.load %arg1[%c0, %c0_0] : memref<256x4xf32, #tpu.memory_space<vmem>>, vector<256x4xf32>
    %c0_1 = arith.constant 0 : index
    %c0_2 = arith.constant 0 : index
    %1 = vector.load %arg2[%c0_1, %c0_2] : memref<4x128xf32, #tpu.memory_space<vmem>>, vector<4x128xf32>
    %c0_3 = arith.constant 0 : index
    %c0_4 = arith.constant 0 : index
    %c0_5 = arith.constant 0 : index
    %2 = vector.load %arg4[%c0_3, %c0_4, %c0_5] : memref<6x1x128xf32, #tpu.memory_space<vmem>>, vector<1x1x128xf32>
    %3 = vector.shape_cast %2 : vector<1x1x128xf32> to vector<1x128xf32>
    %4 = vector.extract_strided_slice %0 {offsets = [0, 0], sizes = [256, 1], strides = [1, 1]} : vector<256x4xf32> to vector<256x1xf32>
    %5 = vector.extract_strided_slice %1 {offsets = [0, 0], sizes = [1, 128], strides = [1, 1]} : vector<4x128xf32> to vector<1x128xf32>
    %6 = vector.broadcast %4 : vector<256x1xf32> to vector<256x128xf32>
    %7 = vector.broadcast %5 : vector<1x128xf32> to vector<256x128xf32>
    %8 = arith.mulf %6, %7 : vector<256x128xf32>
    %9 = vector.broadcast %3 : vector<1x128xf32> to vector<256x128xf32>
    %10 = arith.addf %9, %8 : vector<256x128xf32>
    %11 = vector.extract_strided_slice %0 {offsets = [0, 1], sizes = [256, 1], strides = [1, 1]} : vector<256x4xf32> to vector<256x1xf32>
    %12 = vector.extract_strided_slice %1 {offsets = [1, 0], sizes = [1, 128], strides = [1, 1]} : vector<4x128xf32> to vector<1x128xf32>
    %13 = vector.broadcast %11 : vector<256x1xf32> to vector<256x128xf32>
    %14 = vector.broadcast %12 : vector<1x128xf32> to vector<256x128xf32>
    %15 = arith.mulf %13, %14 : vector<256x128xf32>
    %16 = arith.addf %10, %15 : vector<256x128xf32>
    %17 = vector.extract_strided_slice %0 {offsets = [0, 2], sizes = [256, 1], strides = [1, 1]} : vector<256x4xf32> to vector<256x1xf32>
    %18 = vector.extract_strided_slice %1 {offsets = [2, 0], sizes = [1, 128], strides = [1, 1]} : vector<4x128xf32> to vector<1x128xf32>
    %19 = vector.broadcast %17 : vector<256x1xf32> to vector<256x128xf32>
    %20 = vector.broadcast %18 : vector<1x128xf32> to vector<256x128xf32>
    %21 = arith.mulf %19, %20 : vector<256x128xf32>
    %22 = arith.addf %16, %21 : vector<256x128xf32>
    %23 = vector.extract_strided_slice %0 {offsets = [0, 3], sizes = [256, 1], strides = [1, 1]} : vector<256x4xf32> to vector<256x1xf32>
    %24 = vector.extract_strided_slice %1 {offsets = [3, 0], sizes = [1, 128], strides = [1, 1]} : vector<4x128xf32> to vector<1x128xf32>
    %25 = vector.broadcast %23 : vector<256x1xf32> to vector<256x128xf32>
    %26 = vector.broadcast %24 : vector<1x128xf32> to vector<256x128xf32>
    %27 = arith.mulf %25, %26 : vector<256x128xf32>
    %28 = arith.addf %22, %27 : vector<256x128xf32>
    %cst = arith.constant 0.000000e+00 : f32
    %29 = vector.broadcast %cst : f32 to vector<256x128xf32>
    %30 = arith.maximumf %28, %29 : vector<256x128xf32>
    %31 = arith.truncf %30 : vector<256x128xf32> to vector<256x128xbf16>
    %c0_6 = arith.constant 0 : index
    %c0_7 = arith.constant 0 : index
    %c0_8 = arith.constant 0 : index
    %32 = vector.load %arg3[%c0_6, %c0_7, %c0_8] : memref<5x128x128xbf16, #tpu.memory_space<vmem>>, vector<1x128x128xbf16>
    %33 = vector.shape_cast %32 : vector<1x128x128xbf16> to vector<128x128xbf16>
    %cst_9 = arith.constant dense<0.000000e+00> : vector<256x128xf32>
    %34 = tpu.matmul %31, %33, %cst_9 {dimension_numbers = #tpu.dot_dimension_numbers<[1], [0], [0], [1], [0, 0, 1, 1], [], []>} : vector<256x128xbf16>, vector<128x128xbf16>, vector<256x128xf32> -> vector<256x128xf32>
    %c1 = arith.constant 1 : index
    %c0_10 = arith.constant 0 : index
    %c0_11 = arith.constant 0 : index
    %35 = vector.load %arg4[%c1, %c0_10, %c0_11] : memref<6x1x128xf32, #tpu.memory_space<vmem>>, vector<1x1x128xf32>
    %36 = vector.shape_cast %35 : vector<1x1x128xf32> to vector<1x128xf32>
    %37 = vector.broadcast %36 : vector<1x128xf32> to vector<256x128xf32>
    %38 = arith.addf %34, %37 : vector<256x128xf32>
    %cst_12 = arith.constant 0.000000e+00 : f32
    %39 = vector.broadcast %cst_12 : f32 to vector<256x128xf32>
    %40 = arith.maximumf %38, %39 : vector<256x128xf32>
    %41 = arith.truncf %40 : vector<256x128xf32> to vector<256x128xbf16>
    %c1_13 = arith.constant 1 : index
    %c0_14 = arith.constant 0 : index
    %c0_15 = arith.constant 0 : index
    %42 = vector.load %arg3[%c1_13, %c0_14, %c0_15] : memref<5x128x128xbf16, #tpu.memory_space<vmem>>, vector<1x128x128xbf16>
    %43 = vector.shape_cast %42 : vector<1x128x128xbf16> to vector<128x128xbf16>
    %cst_16 = arith.constant dense<0.000000e+00> : vector<256x128xf32>
    %44 = tpu.matmul %41, %43, %cst_16 {dimension_numbers = #tpu.dot_dimension_numbers<[1], [0], [0], [1], [0, 0, 1, 1], [], []>} : vector<256x128xbf16>, vector<128x128xbf16>, vector<256x128xf32> -> vector<256x128xf32>
    %c2 = arith.constant 2 : index
    %c0_17 = arith.constant 0 : index
    %c0_18 = arith.constant 0 : index
    %45 = vector.load %arg4[%c2, %c0_17, %c0_18] : memref<6x1x128xf32, #tpu.memory_space<vmem>>, vector<1x1x128xf32>
    %46 = vector.shape_cast %45 : vector<1x1x128xf32> to vector<1x128xf32>
    %47 = vector.broadcast %46 : vector<1x128xf32> to vector<256x128xf32>
    %48 = arith.addf %44, %47 : vector<256x128xf32>
    %cst_19 = arith.constant 0.000000e+00 : f32
    %49 = vector.broadcast %cst_19 : f32 to vector<256x128xf32>
    %50 = arith.maximumf %48, %49 : vector<256x128xf32>
    %51 = arith.truncf %50 : vector<256x128xf32> to vector<256x128xbf16>
    %c2_20 = arith.constant 2 : index
    %c0_21 = arith.constant 0 : index
    %c0_22 = arith.constant 0 : index
    %52 = vector.load %arg3[%c2_20, %c0_21, %c0_22] : memref<5x128x128xbf16, #tpu.memory_space<vmem>>, vector<1x128x128xbf16>
    %53 = vector.shape_cast %52 : vector<1x128x128xbf16> to vector<128x128xbf16>
    %cst_23 = arith.constant dense<0.000000e+00> : vector<256x128xf32>
    %54 = tpu.matmul %51, %53, %cst_23 {dimension_numbers = #tpu.dot_dimension_numbers<[1], [0], [0], [1], [0, 0, 1, 1], [], []>} : vector<256x128xbf16>, vector<128x128xbf16>, vector<256x128xf32> -> vector<256x128xf32>
    %c3 = arith.constant 3 : index
    %c0_24 = arith.constant 0 : index
    %c0_25 = arith.constant 0 : index
    %55 = vector.load %arg4[%c3, %c0_24, %c0_25] : memref<6x1x128xf32, #tpu.memory_space<vmem>>, vector<1x1x128xf32>
    %56 = vector.shape_cast %55 : vector<1x1x128xf32> to vector<1x128xf32>
    %57 = vector.broadcast %56 : vector<1x128xf32> to vector<256x128xf32>
    %58 = arith.addf %54, %57 : vector<256x128xf32>
    %cst_26 = arith.constant 0.000000e+00 : f32
    %59 = vector.broadcast %cst_26 : f32 to vector<256x128xf32>
    %60 = arith.maximumf %58, %59 : vector<256x128xf32>
    %61 = arith.truncf %60 : vector<256x128xf32> to vector<256x128xbf16>
    %c3_27 = arith.constant 3 : index
    %c0_28 = arith.constant 0 : index
    %c0_29 = arith.constant 0 : index
    %62 = vector.load %arg3[%c3_27, %c0_28, %c0_29] : memref<5x128x128xbf16, #tpu.memory_space<vmem>>, vector<1x128x128xbf16>
    %63 = vector.shape_cast %62 : vector<1x128x128xbf16> to vector<128x128xbf16>
    %cst_30 = arith.constant dense<0.000000e+00> : vector<256x128xf32>
    %64 = tpu.matmul %61, %63, %cst_30 {dimension_numbers = #tpu.dot_dimension_numbers<[1], [0], [0], [1], [0, 0, 1, 1], [], []>} : vector<256x128xbf16>, vector<128x128xbf16>, vector<256x128xf32> -> vector<256x128xf32>
    %c4 = arith.constant 4 : index
    %c0_31 = arith.constant 0 : index
    %c0_32 = arith.constant 0 : index
    %65 = vector.load %arg4[%c4, %c0_31, %c0_32] : memref<6x1x128xf32, #tpu.memory_space<vmem>>, vector<1x1x128xf32>
    %66 = vector.shape_cast %65 : vector<1x1x128xf32> to vector<1x128xf32>
    %67 = vector.broadcast %66 : vector<1x128xf32> to vector<256x128xf32>
    %68 = arith.addf %64, %67 : vector<256x128xf32>
    %cst_33 = arith.constant 0.000000e+00 : f32
    %69 = vector.broadcast %cst_33 : f32 to vector<256x128xf32>
    %70 = arith.maximumf %68, %69 : vector<256x128xf32>
    %71 = arith.truncf %70 : vector<256x128xf32> to vector<256x128xbf16>
    %c4_34 = arith.constant 4 : index
    %c0_35 = arith.constant 0 : index
    %c0_36 = arith.constant 0 : index
    %72 = vector.load %arg3[%c4_34, %c0_35, %c0_36] : memref<5x128x128xbf16, #tpu.memory_space<vmem>>, vector<1x128x128xbf16>
    %73 = vector.shape_cast %72 : vector<1x128x128xbf16> to vector<128x128xbf16>
    %cst_37 = arith.constant dense<0.000000e+00> : vector<256x128xf32>
    %74 = tpu.matmul %71, %73, %cst_37 {dimension_numbers = #tpu.dot_dimension_numbers<[1], [0], [0], [1], [0, 0, 1, 1], [], []>} : vector<256x128xbf16>, vector<128x128xbf16>, vector<256x128xf32> -> vector<256x128xf32>
    %c5 = arith.constant 5 : index
    %c0_38 = arith.constant 0 : index
    %c0_39 = arith.constant 0 : index
    %75 = vector.load %arg4[%c5, %c0_38, %c0_39] : memref<6x1x128xf32, #tpu.memory_space<vmem>>, vector<1x1x128xf32>
    %76 = vector.shape_cast %75 : vector<1x1x128xf32> to vector<1x128xf32>
    %77 = vector.broadcast %76 : vector<1x128xf32> to vector<256x128xf32>
    %78 = arith.addf %74, %77 : vector<256x128xf32>
    %79 = vector.extract_strided_slice %78 {offsets = [0, 0], sizes = [256, 3], strides = [1, 1]} : vector<256x128xf32> to vector<256x3xf32>
    %c0_40 = arith.constant 0 : index
    %c0_41 = arith.constant 0 : index
    %80 = vector.load %arg5[%c0_40, %c0_41] : memref<256x3xf32, #tpu.memory_space<vmem>>, vector<256x3xf32>
    tpu.vector_store %arg5[%c0_40, %c0_41], %79 {strides = array<i32>} : memref<256x3xf32, #tpu.memory_space<vmem>>, vector<256x3xf32>,
    return
  }
  func.func @transform_0(%arg0: i32) -> (i32, i32) {
    %c0_i32 = arith.constant 0 : i32
    %c0_i32_0 = arith.constant 0 : i32
    return %arg0, %c0_i32 : i32, i32
  }
  func.func @transform_1(%arg0: i32) -> (i32, i32) {
    %c0_i32 = arith.constant 0 : i32
    %c0_i32_0 = arith.constant 0 : i32
    %c0_i32_1 = arith.constant 0 : i32
    return %c0_i32, %c0_i32_0 : i32, i32
  }
  func.func @transform_2(%arg0: i32) -> (i32, i32, i32) {
    %c0_i32 = arith.constant 0 : i32
    %c0_i32_0 = arith.constant 0 : i32
    %c0_i32_1 = arith.constant 0 : i32
    %c0_i32_2 = arith.constant 0 : i32
    return %c0_i32, %c0_i32_0, %c0_i32_1 : i32, i32, i32
  }
  func.func @transform_3(%arg0: i32) -> (i32, i32, i32) {
    %c0_i32 = arith.constant 0 : i32
    %c0_i32_0 = arith.constant 0 : i32
    %c0_i32_1 = arith.constant 0 : i32
    %c0_i32_2 = arith.constant 0 : i32
    return %c0_i32, %c0_i32_0, %c0_i32_1 : i32, i32, i32
  }
  func.func @transform_4(%arg0: i32) -> (i32, i32) {
    %c0_i32 = arith.constant 0 : i32
    %c0_i32_0 = arith.constant 0 : i32
    return %arg0, %c0_i32 : i32, i32
  }
}

</mosaic_0001>

<llo_original>
// kernel: fully_connected2_forward.1
$region0: #{fully_connected2_forward.1}
  #allocation0 [shape = 'u32[]', space=smem, size = 0x4, offset = 0x4, fixed_abs, tag = 'smem constant byte address 0x4 - core index']
  #allocation1 [shape = 'u32[72,128]{1,0:T(1,128)}', space=vmem, size = 0x9000, scoped, tag = 'internal scratch']
  %s0 = inlined_call_operand.vmem [shape: f32[512,4], index: 0, kind: input, shape index: {}]
  %s1 = inlined_call_operand.vmem [shape: f32[4,128], index: 1, kind: input, shape index: {}]
  %s2 = inlined_call_operand.vmem [shape: bf16[5,128,128], index: 2, kind: input, shape index: {}]
  %s3 = inlined_call_operand.vmem [shape: f32[6,1,128], index: 3, kind: input, shape index: {}]
  %s4 = inlined_call_operand.vmem [shape: f32[512,3], index: 4, kind: output, shape index: {}]
  %s5 = sld [smem:[#allocation0]]
  $region49: #{fully_connected2_forward.1} parent=0
    _
  %s7 = ssub.s32 1, %s5
  %s8 = scalar_select 0, %s7, %s5
  loop: start=0, step=1, limit=4
  $region2: #{fully_connected2_forward.1} parent=0 // loop_pre_header
    _
  $region3: #{fully_connected2_forward.1} parent=0 // loop_header
    %s10 = sphi 0, %s14
    %p11 = scmp.ge.s32.totalorder %s10, 4
    %s20 = sphi 0, %s22
    %s23 = sphi 0, %s20
    %s24 = sphi 0, %s23
    %s40 = sphi 0, %s24
    %s44 = sphi 0, %s44
    %s46 = sphi 0, %s44
    %s47 = sphi 0, %s46
    %s61 = sphi 0, %s47
    %s65 = sphi 0, %s65
    %s67 = sphi 0, %s65
    %s68 = sphi 0, %s67
    %s82 = sphi 0, %s68
    %s86 = sphi 0, %s86
    %s88 = sphi 0, %s86
    %s89 = sphi 0, %s88
    %s103 = sphi 0, %s89
    %s109 = sphi 0, %s111
    %s112 = sphi 0, %s109
    %s113 = sphi 0, %s112
    %s129 = sphi 0, %s113
  $region4: #{fully_connected2_forward.1} parent=0 // loop_header_branch
    %13 = sbr.rel (%p11) target = $region8
  $region5: #{fully_connected2_forward.1} parent=0 // loop_body
    %s15 = ssub.s32 %s10, 1
    %s16 = ssub.s32 %s10, 2
    %s17 = sadd.s32 %s10, 1
    %s18 = ssub.s32 %s10, %s17
    %p19 = scmp.eq.s32.totalorder %s18, 0
    %s21 = sadd.s32 %s20, 1
    %s22 = scalar_select %p19, %s20, %s21
    %p25 = pneg %p19
    %p26 = scmp.eq.s32.totalorder %s10, 1
    %p27 = por %p25, %p26
    %p28 = scmp.ne.s32.totalorder %s20, %s23
    %p29 = scmp.eq.s32.totalorder %s10, 0
    %p30 = por %p28, %p29
    %p31 = scmp.ne.s32.totalorder %s20, %s23
    %p32 = scmp.eq.s32.totalorder %s15, 1
    %p33 = por %p31, %p32
    %p34 = scmp.ne.s32.totalorder %s23, %s24
    %p35 = scmp.eq.s32.totalorder %s15, 0
    %p36 = por %p34, %p35
    %p37 = scmp.ne.s32.totalorder %s23, %s24
    %p38 = scmp.eq.s32.totalorder %s16, 1
    %p39 = por %p37, %p38
    %p41 = scmp.ne.s32.totalorder %s24, %s40
    %p42 = scmp.eq.s32.totalorder %s16, 0
    %p43 = por %p41, %p42
    %s45 = sadd.s32 %s44, 1
    %p48 = scmp.eq.s32.totalorder %s10, 1
    %p49 = scmp.ne.s32.totalorder %s44, %s46
    %p50 = scmp.eq.s32.totalorder %s10, 0
    %p51 = por %p49, %p50
    %p52 = scmp.ne.s32.totalorder %s44, %s46
    %p53 = scmp.eq.s32.totalorder %s15, 1
    %p54 = por %p52, %p53
    %p55 = scmp.ne.s32.totalorder %s46, %s47
    %p56 = scmp.eq.s32.totalorder %s15, 0
    %p57 = por %p55, %p56
    %p58 = scmp.ne.s32.totalorder %s46, %s47
    %p59 = scmp.eq.s32.totalorder %s16, 1
    %p60 = por %p58, %p59
    %p62 = scmp.ne.s32.totalorder %s47, %s61
    %p63 = scmp.eq.s32.totalorder %s16, 0
    %p64 = por %p62, %p63
    %s66 = sadd.s32 %s65, 1
    %p69 = scmp.eq.s32.totalorder %s10, 1
    %p70 = scmp.ne.s32.totalorder %s65, %s67
    %p71 = scmp.eq.s32.totalorder %s10, 0
    %p72 = por %p70, %p71
    %p73 = scmp.ne.s32.totalorder %s65, %s67
    %p74 = scmp.eq.s32.totalorder %s15, 1
    %p75 = por %p73, %p74
    %p76 = scmp.ne.s32.totalorder %s67, %s68
    %p77 = scmp.eq.s32.totalorder %s15, 0
    %p78 = por %p76, %p77
    %p79 = scmp.ne.s32.totalorder %s67, %s68
    %p80 = scmp.eq.s32.totalorder %s16, 1
    %p81 = por %p79, %p80
    %p83 = scmp.ne.s32.totalorder %s68, %s82
    %p84 = scmp.eq.s32.totalorder %s16, 0
    %p85 = por %p83, %p84
    %s87 = sadd.s32 %s86, 1
    %p90 = scmp.eq.s32.totalorder %s10, 1
    %p91 = scmp.ne.s32.totalorder %s86, %s88
    %p92 = scmp.eq.s32.totalorder %s10, 0
    %p93 = por %p91, %p92
    %p94 = scmp.ne.s32.totalorder %s86, %s88
    %p95 = scmp.eq.s32.totalorder %s15, 1
    %p96 = por %p94, %p95
    %p97 = scmp.ne.s32.totalorder %s88, %s89
    %p98 = scmp.eq.s32.totalorder %s15, 0
    %p99 = por %p97, %p98
    %p100 = scmp.ne.s32.totalorder %s88, %s89
    %p101 = scmp.eq.s32.totalorder %s16, 1
    %p102 = por %p100, %p101
    %p104 = scmp.ne.s32.totalorder %s89, %s103
    %p105 = scmp.eq.s32.totalorder %s16, 0
    %p106 = por %p104, %p105
    %s107 = ssub.s32 %s10, %s17
    %p108 = scmp.eq.s32.totalorder %s107, 0
    %s110 = sadd.s32 %s109, 1
    %s111 = scalar_select %p108, %s109, %s110
    %p114 = pneg %p108
    %p115 = scmp.eq.s32.totalorder %s10, 1
    %p116 = por %p114, %p115
    %p117 = scmp.ne.s32.totalorder %s109, %s112
    %p118 = scmp.eq.s32.totalorder %s10, 0
    %p119 = por %p117, %p118
    %p120 = scmp.ne.s32.totalorder %s109, %s112
    %p121 = scmp.eq.s32.totalorder %s15, 1
    %p122 = por %p120, %p121
    %p123 = scmp.ne.s32.totalorder %s112, %s113
    %p124 = scmp.eq.s32.totalorder %s15, 0
    %p125 = por %p123, %p124
    %p126 = scmp.ne.s32.totalorder %s112, %s113
    %p127 = scmp.eq.s32.totalorder %s16, 1
    %p128 = por %p126, %p127
    %p130 = scmp.ne.s32.totalorder %s113, %s129
    %p131 = scmp.eq.s32.totalorder %s16, 0
    %p132 = por %p130, %p131
    %p133 = scmp.le.s32.totalorder 1, %s10
    %p134 = scmp.lt.s32.totalorder %s10, 3
    %p135 = pnand %p133, %p134
    %p136 = pneg %p135
    // Predicated region
    $region9: #{fully_connected2_forward.1} parent=5 // pred_check
      _
    $region10: #{fully_connected2_forward.1} parent=5 // pred_check_branch
      %138 = sbr.rel (%p135) target = $region12
    $region11: #{fully_connected2_forward.1} parent=5 // pred_region
      %s139 = ssub.s32 %s10, 1
      // Predicated region
      $region13: #{fully_connected2_forward.1} parent=11 // pred_check
        %p140 = pneg %p57
      $region14: #{fully_connected2_forward.1} parent=11 // pred_check_branch
        %142 = sbr.rel (%p140) target = $region16
      $region15: #{fully_connected2_forward.1} parent=11 // pred_region
        _
      $region16: #{fully_connected2_forward.1} parent=11 // pred_fallthru
        _
      // Predicated region
      $region17: #{fully_connected2_forward.1} parent=11 // pred_check
        %p143 = pneg %p78
      $region18: #{fully_connected2_forward.1} parent=11 // pred_check_branch
        %145 = sbr.rel (%p143) target = $region20
      $region19: #{fully_connected2_forward.1} parent=11 // pred_region
        _
      $region20: #{fully_connected2_forward.1} parent=11 // pred_fallthru
        _
      // Predicated region
      $region21: #{fully_connected2_forward.1} parent=11 // pred_check
        %p146 = pneg %p99
      $region22: #{fully_connected2_forward.1} parent=11 // pred_check_branch
        %148 = sbr.rel (%p146) target = $region24
      $region23: #{fully_connected2_forward.1} parent=11 // pred_region
        _
      $region24: #{fully_connected2_forward.1} parent=11 // pred_fallthru
        _
    $region12: #{fully_connected2_forward.1} parent=5 // pred_fallthru
      _
    %p149 = scmp.lt.s32.totalorder %s10, 2
    // Predicated region
    $region25: #{fully_connected2_forward.1} parent=5 // pred_check
      %p150 = pneg %p149
    $region26: #{fully_connected2_forward.1} parent=5 // pred_check_branch
      %152 = sbr.rel (%p150) target = $region28
    $region27: #{fully_connected2_forward.1} parent=5 // pred_region
      // Predicated region
      $region29: #{fully_connected2_forward.1} parent=27 // pred_check
        %p153 = pneg %p30
      $region30: #{fully_connected2_forward.1} parent=27 // pred_check_branch
        %155 = sbr.rel (%p153) target = $region32
      $region31: #{fully_connected2_forward.1} parent=27 // pred_region
        %s156 = smul.u32 32, %s10
        %p157 = scmp.lt.s32.totalorder %s156, 63
        %s158 = scalar_select %p157, %s156, 63
        %s159 = smul.addr %s158, 8
        %s160 = scalar_lea.vmem %s0, %s159
        %s161 = smul.u32 32, %s10
      $region32: #{fully_connected2_forward.1} parent=27 // pred_fallthru
        _
    $region28: #{fully_connected2_forward.1} parent=5 // pred_fallthru
      _
    %p162 = scmp.le.s32.totalorder 1, %s10
    %p163 = scmp.lt.s32.totalorder %s10, 3
    %p164 = pnand %p162, %p163
    %p165 = pneg %p164
    // Predicated region
    $region33: #{fully_connected2_forward.1} parent=5 // pred_check
      _
    $region34: #{fully_connected2_forward.1} parent=5 // pred_check_branch
      %167 = sbr.rel (%p164) target = $region36
    $region35: #{fully_connected2_forward.1} parent=5 // pred_region
      %s168 = ssub.s32 %s10, 1
      %s169 = smul.u32 32, %s15
      %p170 = scmp.lt.s32.totalorder %s169, 63
      %s171 = scalar_select %p170, %s169, 63
      %s172 = smul.addr %s171, 8
      %s173 = scalar_lea.vmem %s0, %s172
      %p174 = pneg %p36
      %p175 = pneg %p33
      %p176 = pneg %p57
      %p177 = pneg %p54
      %p178 = pneg %p78
      %p179 = pneg %p75
      %p180 = pneg %p99
      %p181 = pneg %p96
      %p182 = pneg %p125
      %p183 = pneg %p122
      %s184 = smul.u32 32, %s15
      %p185 = scmp.lt.s32.totalorder %s184, 63
      %s186 = scalar_select %p185, %s184, 63
      %s187 = smul.addr %s186, 8
      %s188 = scalar_lea.vmem %s4, %s187
      %s189 = smul.u32 32, %s15
      %p190 = scmp.lt.s32.totalorder %s189, 63
      %s191 = scalar_select %p190, %s189, 63
      %s192 = smul.addr %s191, 8
      %s193 = scalar_lea.vmem %s0, %s192
      %s194 = smul.u32 32, %s15
      %s195 = smul.u32 32, %s15
      %p196 = scmp.lt.s32.totalorder %s195, 63
      %s197 = scalar_select %p196, %s195, 63
      %s198 = smul.addr %s197, 8
      %s199 = scalar_lea.vmem %s4, %s198
      %s200 = smul.u32 32, %s15
      %v201 = vld [vmem:[%s193] sm:$0xff]
      %v202 = vld [vmem:[%s193 + $0x8] sm:$0xff]
      %v203 = vld [vmem:[%s193 + $0x10] sm:$0xff]
      %v204 = vld [vmem:[%s193 + $0x18] sm:$0xff]
      %v205 = vld [vmem:[%s193 + $0x20] sm:$0xff]
      %v206 = vld [vmem:[%s193 + $0x28] sm:$0xff]
      %v207 = vld [vmem:[%s193 + $0x30] sm:$0xff]
      %v208 = vld [vmem:[%s193 + $0x38] sm:$0xff]
      %v209 = vld [vmem:[%s193 + $0x40] sm:$0xff]
      %v210 = vld [vmem:[%s193 + $0x48] sm:$0xff]
      %v211 = vld [vmem:[%s193 + $0x50] sm:$0xff]
      %v212 = vld [vmem:[%s193 + $0x58] sm:$0xff]
      %v213 = vld [vmem:[%s193 + $0x60] sm:$0xff]
      %v214 = vld [vmem:[%s193 + $0x68] sm:$0xff]
      %v215 = vld [vmem:[%s193 + $0x70] sm:$0xff]
      %v216 = vld [vmem:[%s193 + $0x78] sm:$0xff]
      %v217 = vld [vmem:[%s193 + $0x80] sm:$0xff]
      %v218 = vld [vmem:[%s193 + $0x88] sm:$0xff]
      %v219 = vld [vmem:[%s193 + $0x90] sm:$0xff]
      %v220 = vld [vmem:[%s193 + $0x98] sm:$0xff]
      %v221 = vld [vmem:[%s193 + $0xa0] sm:$0xff]
      %v222 = vld [vmem:[%s193 + $0xa8] sm:$0xff]
      %v223 = vld [vmem:[%s193 + $0xb0] sm:$0xff]
      %v224 = vld [vmem:[%s193 + $0xb8] sm:$0xff]
      %v225 = vld [vmem:[%s193 + $0xc0] sm:$0xff]
      %v226 = vld [vmem:[%s193 + $0xc8] sm:$0xff]
      %v227 = vld [vmem:[%s193 + $0xd0] sm:$0xff]
      %v228 = vld [vmem:[%s193 + $0xd8] sm:$0xff]
      %v229 = vld [vmem:[%s193 + $0xe0] sm:$0xff]
      %v230 = vld [vmem:[%s193 + $0xe8] sm:$0xff]
      %v231 = vld [vmem:[%s193 + $0xf0] sm:$0xff]
      %v232 = vld [vmem:[%s193 + $0xf8] sm:$0xff]
      %v233 = vld [vmem:[%s1] sm:$0xf]
      %v234 = vld [vmem:[%s3] sm:$0x1]
      %236 = vset.pattern.permute.xlu0 0
      %237 = vperm.xlu0 %236, %v201
      %v238 = vpop.permute.xlu0 %237
      %241 = vset.pattern.permute.xlu0 0
      %242 = vperm.xlu0 %241, %v202
      %v243 = vpop.permute.xlu0 %242
      %246 = vset.pattern.permute.xlu0 0
      %247 = vperm.xlu0 %246, %v203
      %v248 = vpop.permute.xlu0 %247
      %251 = vset.pattern.permute.xlu0 0
      %252 = vperm.xlu0 %251, %v204
      %v253 = vpop.permute.xlu0 %252
      %256 = vset.pattern.permute.xlu0 0
      %257 = vperm.xlu0 %256, %v205
      %v258 = vpop.permute.xlu0 %257
      %261 = vset.pattern.permute.xlu0 0
      %262 = vperm.xlu0 %261, %v206
      %v263 = vpop.permute.xlu0 %262
      %266 = vset.pattern.permute.xlu0 0
      %267 = vperm.xlu0 %266, %v207
      %v268 = vpop.permute.xlu0 %267
      %271 = vset.pattern.permute.xlu0 0
      %272 = vperm.xlu0 %271, %v208
      %v273 = vpop.permute.xlu0 %272
      %276 = vset.pattern.permute.xlu0 0
      %277 = vperm.xlu0 %276, %v209
      %v278 = vpop.permute.xlu0 %277
      %281 = vset.pattern.permute.xlu0 0
      %282 = vperm.xlu0 %281, %v210
      %v283 = vpop.permute.xlu0 %282
      %286 = vset.pattern.permute.xlu0 0
      %287 = vperm.xlu0 %286, %v211
      %v288 = vpop.permute.xlu0 %287
      %291 = vset.pattern.permute.xlu0 0
      %292 = vperm.xlu0 %291, %v212
      %v293 = vpop.permute.xlu0 %292
      %296 = vset.pattern.permute.xlu0 0
      %297 = vperm.xlu0 %296, %v213
      %v298 = vpop.permute.xlu0 %297
      %301 = vset.pattern.permute.xlu0 0
      %302 = vperm.xlu0 %301, %v214
      %v303 = vpop.permute.xlu0 %302
      %306 = vset.pattern.permute.xlu0 0
      %307 = vperm.xlu0 %306, %v215
      %v308 = vpop.permute.xlu0 %307
      %311 = vset.pattern.permute.xlu0 0
      %312 = vperm.xlu0 %311, %v216
      %v313 = vpop.permute.xlu0 %312
      %316 = vset.pattern.permute.xlu0 0
      %317 = vperm.xlu0 %316, %v217
      %v318 = vpop.permute.xlu0 %317
      %321 = vset.pattern.permute.xlu0 0
      %322 = vperm.xlu0 %321, %v218
      %v323 = vpop.permute.xlu0 %322
      %326 = vset.pattern.permute.xlu0 0
      %327 = vperm.xlu0 %326, %v219
      %v328 = vpop.permute.xlu0 %327
      %331 = vset.pattern.permute.xlu0 0
      %332 = vperm.xlu0 %331, %v220
      %v333 = vpop.permute.xlu0 %332
      %336 = vset.pattern.permute.xlu0 0
      %337 = vperm.xlu0 %336, %v221
      %v338 = vpop.permute.xlu0 %337
      %341 = vset.pattern.permute.xlu0 0
      %342 = vperm.xlu0 %341, %v222
      %v343 = vpop.permute.xlu0 %342
      %346 = vset.pattern.permute.xlu0 0
      %347 = vperm.xlu0 %346, %v223
      %v348 = vpop.permute.xlu0 %347
      %351 = vset.pattern.permute.xlu0 0
      %352 = vperm.xlu0 %351, %v224
      %v353 = vpop.permute.xlu0 %352
      %356 = vset.pattern.permute.xlu0 0
      %357 = vperm.xlu0 %356, %v225
      %v358 = vpop.permute.xlu0 %357
      %361 = vset.pattern.permute.xlu0 0
      %362 = vperm.xlu0 %361, %v226
      %v363 = vpop.permute.xlu0 %362
      %366 = vset.pattern.permute.xlu0 0
      %367 = vperm.xlu0 %366, %v227
      %v368 = vpop.permute.xlu0 %367
      %371 = vset.pattern.permute.xlu0 0
      %372 = vperm.xlu0 %371, %v228
      %v373 = vpop.permute.xlu0 %372
      %376 = vset.pattern.permute.xlu0 0
      %377 = vperm.xlu0 %376, %v229
      %v378 = vpop.permute.xlu0 %377
      %381 = vset.pattern.permute.xlu0 0
      %382 = vperm.xlu0 %381, %v230
      %v383 = vpop.permute.xlu0 %382
      %386 = vset.pattern.permute.xlu0 0
      %387 = vperm.xlu0 %386, %v231
      %v388 = vpop.permute.xlu0 %387
      %391 = vset.pattern.permute.xlu0 0
      %392 = vperm.xlu0 %391, %v232
      %v393 = vpop.permute.xlu0 %392
      %v395 = vperm.slane %v233, 0
      %v396 = vmul.f32 %v238, %v395
      %v397 = vmul.f32 %v243, %v395
      %v398 = vmul.f32 %v248, %v395
      %v399 = vmul.f32 %v253, %v395
      %v400 = vmul.f32 %v258, %v395
      %v401 = vmul.f32 %v263, %v395
      %v402 = vmul.f32 %v268, %v395
      %v403 = vmul.f32 %v273, %v395
      %v404 = vmul.f32 %v278, %v395
      %v405 = vmul.f32 %v283, %v395
      %v406 = vmul.f32 %v288, %v395
      %v407 = vmul.f32 %v293, %v395
      %v408 = vmul.f32 %v298, %v395
      %v409 = vmul.f32 %v303, %v395
      %v410 = vmul.f32 %v308, %v395
      %v411 = vmul.f32 %v313, %v395
      %v412 = vmul.f32 %v318, %v395
      %v413 = vmul.f32 %v323, %v395
      %v414 = vmul.f32 %v328, %v395
      %v415 = vmul.f32 %v333, %v395
      %v416 = vmul.f32 %v338, %v395
      %v417 = vmul.f32 %v343, %v395
      %v418 = vmul.f32 %v348, %v395
      %v419 = vmul.f32 %v353, %v395
      %v420 = vmul.f32 %v358, %v395
      %v421 = vmul.f32 %v363, %v395
      %v422 = vmul.f32 %v368, %v395
      %v423 = vmul.f32 %v373, %v395
      %v424 = vmul.f32 %v378, %v395
      %v425 = vmul.f32 %v383, %v395
      %v426 = vmul.f32 %v388, %v395
      %v427 = vmul.f32 %v393, %v395
      %v429 = vperm.slane %v234, 0
      %v431 = vadd.f32 %v429, %v396
      %v432 = vadd.f32 %v429, %v397
      %v433 = vadd.f32 %v429, %v398
      %v434 = vadd.f32 %v429, %v399
      %v435 = vadd.f32 %v429, %v400
      %v436 = vadd.f32 %v429, %v401
      %v437 = vadd.f32 %v429, %v402
      %v438 = vadd.f32 %v429, %v403
      %v439 = vadd.f32 %v429, %v404
      %v440 = vadd.f32 %v429, %v405
      %v441 = vadd.f32 %v429, %v406
      %v442 = vadd.f32 %v429, %v407
      %v443 = vadd.f32 %v429, %v408
      %v444 = vadd.f32 %v429, %v409
      %v445 = vadd.f32 %v429, %v410
      %v446 = vadd.f32 %v429, %v411
      %v447 = vadd.f32 %v429, %v412
      %v448 = vadd.f32 %v429, %v413
      %v449 = vadd.f32 %v429, %v414
      %v450 = vadd.f32 %v429, %v415
      %v451 = vadd.f32 %v429, %v416
      %v452 = vadd.f32 %v429, %v417
      %v453 = vadd.f32 %v429, %v418
      %v454 = vadd.f32 %v429, %v419
      %v455 = vadd.f32 %v429, %v420
      %v456 = vadd.f32 %v429, %v421
      %v457 = vadd.f32 %v429, %v422
      %v458 = vadd.f32 %v429, %v423
      %v459 = vadd.f32 %v429, %v424
      %v460 = vadd.f32 %v429, %v425
      %v461 = vadd.f32 %v429, %v426
      %v462 = vadd.f32 %v429, %v427
      %463 = vset.pattern.permute.xlu0 1
      %464 = vperm.xlu0 %463, %v201
      %v465 = vpop.permute.xlu0 %464
      %467 = vset.pattern.permute.xlu0 1
      %468 = vperm.xlu0 %467, %v202
      %v469 = vpop.permute.xlu0 %468
      %471 = vset.pattern.permute.xlu0 1
      %472 = vperm.xlu0 %471, %v203
      %v473 = vpop.permute.xlu0 %472
      %475 = vset.pattern.permute.xlu0 1
      %476 = vperm.xlu0 %475, %v204
      %v477 = vpop.permute.xlu0 %476
      %479 = vset.pattern.permute.xlu0 1
      %480 = vperm.xlu0 %479, %v205
      %v481 = vpop.permute.xlu0 %480
      %483 = vset.pattern.permute.xlu0 1
      %484 = vperm.xlu0 %483, %v206
      %v485 = vpop.permute.xlu0 %484
      %487 = vset.pattern.permute.xlu0 1
      %488 = vperm.xlu0 %487, %v207
      %v489 = vpop.permute.xlu0 %488
      %491 = vset.pattern.permute.xlu0 1
      %492 = vperm.xlu0 %491, %v208
      %v493 = vpop.permute.xlu0 %492
      %495 = vset.pattern.permute.xlu0 1
      %496 = vperm.xlu0 %495, %v209
      %v497 = vpop.permute.xlu0 %496
      %499 = vset.pattern.permute.xlu0 1
      %500 = vperm.xlu0 %499, %v210
      %v501 = vpop.permute.xlu0 %500
      %503 = vset.pattern.permute.xlu0 1
      %504 = vperm.xlu0 %503, %v211
      %v505 = vpop.permute.xlu0 %504
      %507 = vset.pattern.permute.xlu0 1
      %508 = vperm.xlu0 %507, %v212
      %v509 = vpop.permute.xlu0 %508
      %511 = vset.pattern.permute.xlu0 1
      %512 = vperm.xlu0 %511, %v213
      %v513 = vpop.permute.xlu0 %512
      %515 = vset.pattern.permute.xlu0 1
      %516 = vperm.xlu0 %515, %v214
      %v517 = vpop.permute.xlu0 %516
      %519 = vset.pattern.permute.xlu0 1
      %520 = vperm.xlu0 %519, %v215
      %v521 = vpop.permute.xlu0 %520
      %523 = vset.pattern.permute.xlu0 1
      %524 = vperm.xlu0 %523, %v216
      %v525 = vpop.permute.xlu0 %524
      %527 = vset.pattern.permute.xlu0 1
      %528 = vperm.xlu0 %527, %v217
      %v529 = vpop.permute.xlu0 %528
      %531 = vset.pattern.permute.xlu0 1
      %532 = vperm.xlu0 %531, %v218
      %v533 = vpop.permute.xlu0 %532
      %535 = vset.pattern.permute.xlu0 1
      %536 = vperm.xlu0 %535, %v219
      %v537 = vpop.permute.xlu0 %536
      %539 = vset.pattern.permute.xlu0 1
      %540 = vperm.xlu0 %539, %v220
      %v541 = vpop.permute.xlu0 %540
      %543 = vset.pattern.permute.xlu0 1
      %544 = vperm.xlu0 %543, %v221
      %v545 = vpop.permute.xlu0 %544
      %547 = vset.pattern.permute.xlu0 1
      %548 = vperm.xlu0 %547, %v222
      %v549 = vpop.permute.xlu0 %548
      %551 = vset.pattern.permute.xlu0 1
      %552 = vperm.xlu0 %551, %v223
      %v553 = vpop.permute.xlu0 %552
      %555 = vset.pattern.permute.xlu0 1
      %556 = vperm.xlu0 %555, %v224
      %v557 = vpop.permute.xlu0 %556
      %559 = vset.pattern.permute.xlu0 1
      %560 = vperm.xlu0 %559, %v225
      %v561 = vpop.permute.xlu0 %560
      %563 = vset.pattern.permute.xlu0 1
      %564 = vperm.xlu0 %563, %v226
      %v565 = vpop.permute.xlu0 %564
      %567 = vset.pattern.permute.xlu0 1
      %568 = vperm.xlu0 %567, %v227
      %v569 = vpop.permute.xlu0 %568
      %571 = vset.pattern.permute.xlu0 1
      %572 = vperm.xlu0 %571, %v228
      %v573 = vpop.permute.xlu0 %572
      %575 = vset.pattern.permute.xlu0 1
      %576 = vperm.xlu0 %575, %v229
      %v577 = vpop.permute.xlu0 %576
      %579 = vset.pattern.permute.xlu0 1
      %580 = vperm.xlu0 %579, %v230
      %v581 = vpop.permute.xlu0 %580
      %583 = vset.pattern.permute.xlu0 1
      %584 = vperm.xlu0 %583, %v231
      %v585 = vpop.permute.xlu0 %584
      %587 = vset.pattern.permute.xlu0 1
      %588 = vperm.xlu0 %587, %v232
      %v589 = vpop.permute.xlu0 %588
      %v591 = vperm.slane %v233, 1
      %v592 = vmul.f32 %v465, %v591
      %v593 = vmul.f32 %v469, %v591
      %v594 = vmul.f32 %v473, %v591
      %v595 = vmul.f32 %v477, %v591
      %v596 = vmul.f32 %v481, %v591
      %v597 = vmul.f32 %v485, %v591
      %v598 = vmul.f32 %v489, %v591
      %v599 = vmul.f32 %v493, %v591
      %v600 = vmul.f32 %v497, %v591
      %v601 = vmul.f32 %v501, %v591
      %v602 = vmul.f32 %v505, %v591
      %v603 = vmul.f32 %v509, %v591
      %v604 = vmul.f32 %v513, %v591
      %v605 = vmul.f32 %v517, %v591
      %v606 = vmul.f32 %v521, %v591
      %v607 = vmul.f32 %v525, %v591
      %v608 = vmul.f32 %v529, %v591
      %v609 = vmul.f32 %v533, %v591
      %v610 = vmul.f32 %v537, %v591
      %v611 = vmul.f32 %v541, %v591
      %v612 = vmul.f32 %v545, %v591
      %v613 = vmul.f32 %v549, %v591
      %v614 = vmul.f32 %v553, %v591
      %v615 = vmul.f32 %v557, %v591
      %v616 = vmul.f32 %v561, %v591
      %v617 = vmul.f32 %v565, %v591
      %v618 = vmul.f32 %v569, %v591
      %v619 = vmul.f32 %v573, %v591
      %v620 = vmul.f32 %v577, %v591
      %v621 = vmul.f32 %v581, %v591
      %v622 = vmul.f32 %v585, %v591
      %v623 = vmul.f32 %v589, %v591
      %v624 = vadd.f32 %v431, %v592
      %v625 = vadd.f32 %v432, %v593
      %v626 = vadd.f32 %v433, %v594
      %v627 = vadd.f32 %v434, %v595
      %v628 = vadd.f32 %v435, %v596
      %v629 = vadd.f32 %v436, %v597
      %v630 = vadd.f32 %v437, %v598
      %v631 = vadd.f32 %v438, %v599
      %v632 = vadd.f32 %v439, %v600
      %v633 = vadd.f32 %v440, %v601
      %v634 = vadd.f32 %v441, %v602
      %v635 = vadd.f32 %v442, %v603
      %v636 = vadd.f32 %v443, %v604
      %v637 = vadd.f32 %v444, %v605
      %v638 = vadd.f32 %v445, %v606
      %v639 = vadd.f32 %v446, %v607
      %v640 = vadd.f32 %v447, %v608
      %v641 = vadd.f32 %v448, %v609
      %v642 = vadd.f32 %v449, %v610
      %v643 = vadd.f32 %v450, %v611
      %v644 = vadd.f32 %v451, %v612
      %v645 = vadd.f32 %v452, %v613
      %v646 = vadd.f32 %v453, %v614
      %v647 = vadd.f32 %v454, %v615
      %v648 = vadd.f32 %v455, %v616
      %v649 = vadd.f32 %v456, %v617
      %v650 = vadd.f32 %v457, %v618
      %v651 = vadd.f32 %v458, %v619
      %v652 = vadd.f32 %v459, %v620
      %v653 = vadd.f32 %v460, %v621
      %v654 = vadd.f32 %v461, %v622
      %v655 = vadd.f32 %v462, %v623
      %656 = vset.pattern.permute.xlu0 2
      %657 = vperm.xlu0 %656, %v201
      %v658 = vpop.permute.xlu0 %657
      %660 = vset.pattern.permute.xlu0 2
      %661 = vperm.xlu0 %660, %v202
      %v662 = vpop.permute.xlu0 %661
      %664 = vset.pattern.permute.xlu0 2
      %665 = vperm.xlu0 %664, %v203
      %v666 = vpop.permute.xlu0 %665
      %668 = vset.pattern.permute.xlu0 2
      %669 = vperm.xlu0 %668, %v204
      %v670 = vpop.permute.xlu0 %669
      %672 = vset.pattern.permute.xlu0 2
      %673 = vperm.xlu0 %672, %v205
      %v674 = vpop.permute.xlu0 %673
      %676 = vset.pattern.permute.xlu0 2
      %677 = vperm.xlu0 %676, %v206
      %v678 = vpop.permute.xlu0 %677
      %680 = vset.pattern.permute.xlu0 2
      %681 = vperm.xlu0 %680, %v207
      %v682 = vpop.permute.xlu0 %681
      %684 = vset.pattern.permute.xlu0 2
      %685 = vperm.xlu0 %684, %v208
      %v686 = vpop.permute.xlu0 %685
      %688 = vset.pattern.permute.xlu0 2
      %689 = vperm.xlu0 %688, %v209
      %v690 = vpop.permute.xlu0 %689
      %692 = vset.pattern.permute.xlu0 2
      %693 = vperm.xlu0 %692, %v210
      %v694 = vpop.permute.xlu0 %693
      %696 = vset.pattern.permute.xlu0 2
      %697 = vperm.xlu0 %696, %v211
      %v698 = vpop.permute.xlu0 %697
      %700 = vset.pattern.permute.xlu0 2
      %701 = vperm.xlu0 %700, %v212
      %v702 = vpop.permute.xlu0 %701
      %704 = vset.pattern.permute.xlu0 2
      %705 = vperm.xlu0 %704, %v213
      %v706 = vpop.permute.xlu0 %705
      %708 = vset.pattern.permute.xlu0 2
      %709 = vperm.xlu0 %708, %v214
      %v710 = vpop.permute.xlu0 %709
      %712 = vset.pattern.permute.xlu0 2
      %713 = vperm.xlu0 %712, %v215
      %v714 = vpop.permute.xlu0 %713
      %716 = vset.pattern.permute.xlu0 2
      %717 = vperm.xlu0 %716, %v216
      %v718 = vpop.permute.xlu0 %717
      %720 = vset.pattern.permute.xlu0 2
      %721 = vperm.xlu0 %720, %v217
      %v722 = vpop.permute.xlu0 %721
      %724 = vset.pattern.permute.xlu0 2
      %725 = vperm.xlu0 %724, %v218
      %v726 = vpop.permute.xlu0 %725
      %728 = vset.pattern.permute.xlu0 2
      %729 = vperm.xlu0 %728, %v219
      %v730 = vpop.permute.xlu0 %729
      %732 = vset.pattern.permute.xlu0 2
      %733 = vperm.xlu0 %732, %v220
      %v734 = vpop.permute.xlu0 %733
      %736 = vset.pattern.permute.xlu0 2
      %737 = vperm.xlu0 %736, %v221
      %v738 = vpop.permute.xlu0 %737
      %740 = vset.pattern.permute.xlu0 2
      %741 = vperm.xlu0 %740, %v222
      %v742 = vpop.permute.xlu0 %741
      %744 = vset.pattern.permute.xlu0 2
      %745 = vperm.xlu0 %744, %v223
      %v746 = vpop.permute.xlu0 %745
      %748 = vset.pattern.permute.xlu0 2
      %749 = vperm.xlu0 %748, %v224
      %v750 = vpop.permute.xlu0 %749
      %752 = vset.pattern.permute.xlu0 2
      %753 = vperm.xlu0 %752, %v225
      %v754 = vpop.permute.xlu0 %753
      %756 = vset.pattern.permute.xlu0 2
      %757 = vperm.xlu0 %756, %v226
      %v758 = vpop.permute.xlu0 %757
      %760 = vset.pattern.permute.xlu0 2
      %761 = vperm.xlu0 %760, %v227
      %v762 = vpop.permute.xlu0 %761
      %764 = vset.pattern.permute.xlu0 2
      %765 = vperm.xlu0 %764, %v228
      %v766 = vpop.permute.xlu0 %765
      %768 = vset.pattern.permute.xlu0 2
      %769 = vperm.xlu0 %768, %v229
      %v770 = vpop.permute.xlu0 %769
      %772 = vset.pattern.permute.xlu0 2
      %773 = vperm.xlu0 %772, %v230
      %v774 = vpop.permute.xlu0 %773
      %776 = vset.pattern.permute.xlu0 2
      %777 = vperm.xlu0 %776, %v231
      %v778 = vpop.permute.xlu0 %777
      %780 = vset.pattern.permute.xlu0 2
      %781 = vperm.xlu0 %780, %v232
      %v782 = vpop.permute.xlu0 %781
      %v784 = vperm.slane %v233, 2
      %v785 = vmul.f32 %v658, %v784
      %v786 = vmul.f32 %v662, %v784
      %v787 = vmul.f32 %v666, %v784
      %v788 = vmul.f32 %v670, %v784
      %v789 = vmul.f32 %v674, %v784
      %v790 = vmul.f32 %v678, %v784
      %v791 = vmul.f32 %v682, %v784
      %v792 = vmul.f32 %v686, %v784
      %v793 = vmul.f32 %v690, %v784
      %v794 = vmul.f32 %v694, %v784
      %v795 = vmul.f32 %v698, %v784
      %v796 = vmul.f32 %v702, %v784
      %v797 = vmul.f32 %v706, %v784
      %v798 = vmul.f32 %v710, %v784
      %v799 = vmul.f32 %v714, %v784
      %v800 = vmul.f32 %v718, %v784
      %v801 = vmul.f32 %v722, %v784
      %v802 = vmul.f32 %v726, %v784
      %v803 = vmul.f32 %v730, %v784
      %v804 = vmul.f32 %v734, %v784
      %v805 = vmul.f32 %v738, %v784
      %v806 = vmul.f32 %v742, %v784
      %v807 = vmul.f32 %v746, %v784
      %v808 = vmul.f32 %v750, %v784
      %v809 = vmul.f32 %v754, %v784
      %v810 = vmul.f32 %v758, %v784
      %v811 = vmul.f32 %v762, %v784
      %v812 = vmul.f32 %v766, %v784
      %v813 = vmul.f32 %v770, %v784
      %v814 = vmul.f32 %v774, %v784
      %v815 = vmul.f32 %v778, %v784
      %v816 = vmul.f32 %v782, %v784
      %v817 = vadd.f32 %v624, %v785
      %v818 = vadd.f32 %v625, %v786
      %v819 = vadd.f32 %v626, %v787
      %v820 = vadd.f32 %v627, %v788
      %v821 = vadd.f32 %v628, %v789
      %v822 = vadd.f32 %v629, %v790
      %v823 = vadd.f32 %v630, %v791
      %v824 = vadd.f32 %v631, %v792
      %v825 = vadd.f32 %v632, %v793
      %v826 = vadd.f32 %v633, %v794
      %v827 = vadd.f32 %v634, %v795
      %v828 = vadd.f32 %v635, %v796
      %v829 = vadd.f32 %v636, %v797
      %v830 = vadd.f32 %v637, %v798
      %v831 = vadd.f32 %v638, %v799
      %v832 = vadd.f32 %v639, %v800
      %v833 = vadd.f32 %v640, %v801
      %v834 = vadd.f32 %v641, %v802
      %v835 = vadd.f32 %v642, %v803
      %v836 = vadd.f32 %v643, %v804
      %v837 = vadd.f32 %v644, %v805
      %v838 = vadd.f32 %v645, %v806
      %v839 = vadd.f32 %v646, %v807
      %v840 = vadd.f32 %v647, %v808
      %v841 = vadd.f32 %v648, %v809
      %v842 = vadd.f32 %v649, %v810
      %v843 = vadd.f32 %v650, %v811
      %v844 = vadd.f32 %v651, %v812
      %v845 = vadd.f32 %v652, %v813
      %v846 = vadd.f32 %v653, %v814
      %v847 = vadd.f32 %v654, %v815
      %v848 = vadd.f32 %v655, %v816
      %849 = vset.pattern.permute.xlu0 3
      %850 = vperm.xlu0 %849, %v201
      %v851 = vpop.permute.xlu0 %850
      %853 = vset.pattern.permute.xlu0 3
      %854 = vperm.xlu0 %853, %v202
      %v855 = vpop.permute.xlu0 %854
      %857 = vset.pattern.permute.xlu0 3
      %858 = vperm.xlu0 %857, %v203
      %v859 = vpop.permute.xlu0 %858
      %861 = vset.pattern.permute.xlu0 3
      %862 = vperm.xlu0 %861, %v204
      %v863 = vpop.permute.xlu0 %862
      %865 = vset.pattern.permute.xlu0 3
      %866 = vperm.xlu0 %865, %v205
      %v867 = vpop.permute.xlu0 %866
      %869 = vset.pattern.permute.xlu0 3
      %870 = vperm.xlu0 %869, %v206
      %v871 = vpop.permute.xlu0 %870
      %873 = vset.pattern.permute.xlu0 3
      %874 = vperm.xlu0 %873, %v207
      %v875 = vpop.permute.xlu0 %874
      %877 = vset.pattern.permute.xlu0 3
      %878 = vperm.xlu0 %877, %v208
      %v879 = vpop.permute.xlu0 %878
      %881 = vset.pattern.permute.xlu0 3
      %882 = vperm.xlu0 %881, %v209
      %v883 = vpop.permute.xlu0 %882
      %885 = vset.pattern.permute.xlu0 3
      %886 = vperm.xlu0 %885, %v210
      %v887 = vpop.permute.xlu0 %886
      %889 = vset.pattern.permute.xlu0 3
      %890 = vperm.xlu0 %889, %v211
      %v891 = vpop.permute.xlu0 %890
      %893 = vset.pattern.permute.xlu0 3
      %894 = vperm.xlu0 %893, %v212
      %v895 = vpop.permute.xlu0 %894
      %897 = vset.pattern.permute.xlu0 3
      %898 = vperm.xlu0 %897, %v213
      %v899 = vpop.permute.xlu0 %898
      %901 = vset.pattern.permute.xlu0 3
      %902 = vperm.xlu0 %901, %v214
      %v903 = vpop.permute.xlu0 %902
      %905 = vset.pattern.permute.xlu0 3
      %906 = vperm.xlu0 %905, %v215
      %v907 = vpop.permute.xlu0 %906
      %909 = vset.pattern.permute.xlu0 3
      %910 = vperm.xlu0 %909, %v216
      %v911 = vpop.permute.xlu0 %910
      %913 = vset.pattern.permute.xlu0 3
      %914 = vperm.xlu0 %913, %v217
      %v915 = vpop.permute.xlu0 %914
      %917 = vset.pattern.permute.xlu0 3
      %918 = vperm.xlu0 %917, %v218
      %v919 = vpop.permute.xlu0 %918
      %921 = vset.pattern.permute.xlu0 3
      %922 = vperm.xlu0 %921, %v219
      %v923 = vpop.permute.xlu0 %922
      %925 = vset.pattern.permute.xlu0 3
      %926 = vperm.xlu0 %925, %v220
      %v927 = vpop.permute.xlu0 %926
      %929 = vset.pattern.permute.xlu0 3
      %930 = vperm.xlu0 %929, %v221
      %v931 = vpop.permute.xlu0 %930
      %933 = vset.pattern.permute.xlu0 3
      %934 = vperm.xlu0 %933, %v222
      %v935 = vpop.permute.xlu0 %934
      %937 = vset.pattern.permute.xlu0 3
      %938 = vperm.xlu0 %937, %v223
      %v939 = vpop.permute.xlu0 %938
      %941 = vset.pattern.permute.xlu0 3
      %942 = vperm.xlu0 %941, %v224
      %v943 = vpop.permute.xlu0 %942
      %945 = vset.pattern.permute.xlu0 3
      %946 = vperm.xlu0 %945, %v225
      %v947 = vpop.permute.xlu0 %946
      %949 = vset.pattern.permute.xlu0 3
      %950 = vperm.xlu0 %949, %v226
      %v951 = vpop.permute.xlu0 %950
      %953 = vset.pattern.permute.xlu0 3
      %954 = vperm.xlu0 %953, %v227
      %v955 = vpop.permute.xlu0 %954
      %957 = vset.pattern.permute.xlu0 3
      %958 = vperm.xlu0 %957, %v228
      %v959 = vpop.permute.xlu0 %958
      %961 = vset.pattern.permute.xlu0 3
      %962 = vperm.xlu0 %961, %v229
      %v963 = vpop.permute.xlu0 %962
      %965 = vset.pattern.permute.xlu0 3
      %966 = vperm.xlu0 %965, %v230
      %v967 = vpop.permute.xlu0 %966
      %969 = vset.pattern.permute.xlu0 3
      %970 = vperm.xlu0 %969, %v231
      %v971 = vpop.permute.xlu0 %970
      %973 = vset.pattern.permute.xlu0 3
      %974 = vperm.xlu0 %973, %v232
      %v975 = vpop.permute.xlu0 %974
      %v977 = vperm.slane %v233, 3
      %v978 = vmul.f32 %v851, %v977
      %v979 = vmul.f32 %v855, %v977
      %v980 = vmul.f32 %v859, %v977
      %v981 = vmul.f32 %v863, %v977
      %v982 = vmul.f32 %v867, %v977
      %v983 = vmul.f32 %v871, %v977
      %v984 = vmul.f32 %v875, %v977
      %v985 = vmul.f32 %v879, %v977
      %v986 = vmul.f32 %v883, %v977
      %v987 = vmul.f32 %v887, %v977
      %v988 = vmul.f32 %v891, %v977
      %v989 = vmul.f32 %v895, %v977
      %v990 = vmul.f32 %v899, %v977
      %v991 = vmul.f32 %v903, %v977
      %v992 = vmul.f32 %v907, %v977
      %v993 = vmul.f32 %v911, %v977
      %v994 = vmul.f32 %v915, %v977
      %v995 = vmul.f32 %v919, %v977
      %v996 = vmul.f32 %v923, %v977
      %v997 = vmul.f32 %v927, %v977
      %v998 = vmul.f32 %v931, %v977
      %v999 = vmul.f32 %v935, %v977
      %v1000 = vmul.f32 %v939, %v977
      %v1001 = vmul.f32 %v943, %v977
      %v1002 = vmul.f32 %v947, %v977
      %v1003 = vmul.f32 %v951, %v977
      %v1004 = vmul.f32 %v955, %v977
      %v1005 = vmul.f32 %v959, %v977
      %v1006 = vmul.f32 %v963, %v977
      %v1007 = vmul.f32 %v967, %v977
      %v1008 = vmul.f32 %v971, %v977
      %v1009 = vmul.f32 %v975, %v977
      %v1010 = vadd.f32 %v817, %v978
      %v1011 = vadd.f32 %v818, %v979
      %v1012 = vadd.f32 %v819, %v980
      %v1013 = vadd.f32 %v820, %v981
      %v1014 = vadd.f32 %v821, %v982
      %v1015 = vadd.f32 %v822, %v983
      %v1016 = vadd.f32 %v823, %v984
      %v1017 = vadd.f32 %v824, %v985
      %v1018 = vadd.f32 %v825, %v986
      %v1019 = vadd.f32 %v826, %v987
      %v1020 = vadd.f32 %v827, %v988
      %v1021 = vadd.f32 %v828, %v989
      %v1022 = vadd.f32 %v829, %v990
      %v1023 = vadd.f32 %v830, %v991
      %v1024 = vadd.f32 %v831, %v992
      %v1025 = vadd.f32 %v832, %v993
      %v1026 = vadd.f32 %v833, %v994
      %v1027 = vadd.f32 %v834, %v995
      %v1028 = vadd.f32 %v835, %v996
      %v1029 = vadd.f32 %v836, %v997
      %v1030 = vadd.f32 %v837, %v998
      %v1031 = vadd.f32 %v838, %v999
      %v1032 = vadd.f32 %v839, %v1000
      %v1033 = vadd.f32 %v840, %v1001
      %v1034 = vadd.f32 %v841, %v1002
      %v1035 = vadd.f32 %v842, %v1003
      %v1036 = vadd.f32 %v843, %v1004
      %v1037 = vadd.f32 %v844, %v1005
      %v1038 = vadd.f32 %v845, %v1006
      %v1039 = vadd.f32 %v846, %v1007
      %v1040 = vadd.f32 %v847, %v1008
      %v1041 = vadd.f32 %v848, %v1009
      %v1042 = vmax.f32 %v1010, 0.0
      %v1043 = vmax.f32 %v1011, 0.0
      %v1044 = vmax.f32 %v1012, 0.0
      %v1045 = vmax.f32 %v1013, 0.0
      %v1046 = vmax.f32 %v1014, 0.0
      %v1047 = vmax.f32 %v1015, 0.0
      %v1048 = vmax.f32 %v1016, 0.0
      %v1049 = vmax.f32 %v1017, 0.0
      %v1050 = vmax.f32 %v1018, 0.0
      %v1051 = vmax.f32 %v1019, 0.0
      %v1052 = vmax.f32 %v1020, 0.0
      %v1053 = vmax.f32 %v1021, 0.0
      %v1054 = vmax.f32 %v1022, 0.0
      %v1055 = vmax.f32 %v1023, 0.0
      %v1056 = vmax.f32 %v1024, 0.0
      %v1057 = vmax.f32 %v1025, 0.0
      %v1058 = vmax.f32 %v1026, 0.0
      %v1059 = vmax.f32 %v1027, 0.0
      %v1060 = vmax.f32 %v1028, 0.0
      %v1061 = vmax.f32 %v1029, 0.0
      %v1062 = vmax.f32 %v1030, 0.0
      %v1063 = vmax.f32 %v1031, 0.0
      %v1064 = vmax.f32 %v1032, 0.0
      %v1065 = vmax.f32 %v1033, 0.0
      %v1066 = vmax.f32 %v1034, 0.0
      %v1067 = vmax.f32 %v1035, 0.0
      %v1068 = vmax.f32 %v1036, 0.0
      %v1069 = vmax.f32 %v1037, 0.0
      %v1070 = vmax.f32 %v1038, 0.0
      %v1071 = vmax.f32 %v1039, 0.0
      %v1072 = vmax.f32 %v1040, 0.0
      %v1073 = vmax.f32 %v1041, 0.0
      %v1074 = vpack.c.bf16 %v1043, %v1042
      %v1075 = vpack.c.bf16 %v1045, %v1044
      %v1076 = vpack.c.bf16 %v1047, %v1046
      %v1077 = vpack.c.bf16 %v1049, %v1048
      %v1078 = vpack.c.bf16 %v1051, %v1050
      %v1079 = vpack.c.bf16 %v1053, %v1052
      %v1080 = vpack.c.bf16 %v1055, %v1054
      %v1081 = vpack.c.bf16 %v1057, %v1056
      %v1082 = vpack.c.bf16 %v1059, %v1058
      %v1083 = vpack.c.bf16 %v1061, %v1060
      %v1084 = vpack.c.bf16 %v1063, %v1062
      %v1085 = vpack.c.bf16 %v1065, %v1064
      %v1086 = vpack.c.bf16 %v1067, %v1066
      %v1087 = vpack.c.bf16 %v1069, %v1068
      %v1088 = vpack.c.bf16 %v1071, %v1070
      %v1089 = vpack.c.bf16 %v1073, %v1072
      %v1090 = vld [vmem:[%s2] sm:$0xf]
      %v1091 = vld [vmem:[%s2 + $0x4] sm:$0xf]
      %v1092 = vld [vmem:[%s2 + $0x8] sm:$0xf]
      %v1093 = vld [vmem:[%s2 + $0xc] sm:$0xf]
      %v1094 = vld [vmem:[%s2 + $0x10] sm:$0xf]
      %v1095 = vld [vmem:[%s2 + $0x14] sm:$0xf]
      %v1096 = vld [vmem:[%s2 + $0x18] sm:$0xf]
      %v1097 = vld [vmem:[%s2 + $0x1c] sm:$0xf]
      %v1098 = vld [vmem:[%s2 + $0x20] sm:$0xf]
      %v1099 = vld [vmem:[%s2 + $0x24] sm:$0xf]
      %v1100 = vld [vmem:[%s2 + $0x28] sm:$0xf]
      %v1101 = vld [vmem:[%s2 + $0x2c] sm:$0xf]
      %v1102 = vld [vmem:[%s2 + $0x30] sm:$0xf]
      %v1103 = vld [vmem:[%s2 + $0x34] sm:$0xf]
      %v1104 = vld [vmem:[%s2 + $0x38] sm:$0xf]
      %v1105 = vld [vmem:[%s2 + $0x3c] sm:$0xf]
      %s1106 = scalar_lea.vmem %s3, 1
      %v1107 = vld [vmem:[%s1106] sm:$0x1]
      %v1109 = vperm.slane %v1107, 0
      %v1127 = vunpack.c.l.b16 %v1090
      %v1128 = vunpack.c.l.b16 %v1091
      %v1129 = vunpack.c.l.b16 %v1092
      %v1130 = vunpack.c.l.b16 %v1093
      %v1131 = vunpack.c.l.b16 %v1094
      %v1132 = vunpack.c.l.b16 %v1095
      %v1133 = vunpack.c.l.b16 %v1096
      %v1134 = vunpack.c.l.b16 %v1097
      %v1135 = vunpack.c.l.b16 %v1098
      %v1136 = vunpack.c.l.b16 %v1099
      %v1137 = vunpack.c.l.b16 %v1100
      %v1138 = vunpack.c.l.b16 %v1101
      %v1139 = vunpack.c.l.b16 %v1102
      %v1140 = vunpack.c.l.b16 %v1103
      %v1141 = vunpack.c.l.b16 %v1104
      %v1142 = vunpack.c.l.b16 %v1105
      %v1143 = vpack.c.b16 %v1128, %v1127
      %v1144 = vpack.c.b16 %v1130, %v1129
      %v1145 = vpack.c.b16 %v1132, %v1131
      %v1146 = vpack.c.b16 %v1134, %v1133
      %v1147 = vpack.c.b16 %v1136, %v1135
      %v1148 = vpack.c.b16 %v1138, %v1137
      %v1149 = vpack.c.b16 %v1140, %v1139
      %v1150 = vpack.c.b16 %v1142, %v1141
      %1159 = vmatpush.bf16.msra.mxu0 %v1150
      %1160 = vmatpush.bf16.msra.mxu0 %v1149
      %1161 = vmatpush.bf16.msra.mxu0 %v1148
      %1162 = vmatpush.bf16.msra.mxu0 %v1147
      %1163 = vmatpush.bf16.msra.mxu0 %v1146
      %1164 = vmatpush.bf16.msra.mxu0 %v1145
      %1165 = vmatpush.bf16.msra.mxu0 %v1144
      %1166 = vmatpush.bf16.msra.mxu0 %v1143
      %1167 = vmatmul.bf16.gmra.mxu0 %v1074
      %v1168 = vpop.f32.mrf.mxu0
      %v1169 = vadd.f32 %v1109, %v1168
      %v1170 = vpop.f32.mrf.mxu0
      %v1171 = vadd.f32 %v1109, %v1170
      %1172 = vmatmul.bf16.gmra.mxu0 %v1075
      %v1173 = vpop.f32.mrf.mxu0
      %v1174 = vadd.f32 %v1109, %v1173
      %v1175 = vpop.f32.mrf.mxu0
      %v1176 = vadd.f32 %v1109, %v1175
      %1177 = vmatmul.bf16.gmra.mxu0 %v1076
      %v1178 = vpop.f32.mrf.mxu0
      %v1179 = vadd.f32 %v1109, %v1178
      %v1180 = vpop.f32.mrf.mxu0
      %v1181 = vadd.f32 %v1109, %v1180
      %1182 = vmatmul.bf16.gmra.mxu0 %v1077
      %v1183 = vpop.f32.mrf.mxu0
      %v1184 = vadd.f32 %v1109, %v1183
      %v1185 = vpop.f32.mrf.mxu0
      %v1186 = vadd.f32 %v1109, %v1185
      %1187 = vmatmul.bf16.gmra.mxu0 %v1078
      %v1188 = vpop.f32.mrf.mxu0
      %v1189 = vadd.f32 %v1109, %v1188
      %v1190 = vpop.f32.mrf.mxu0
      %v1191 = vadd.f32 %v1109, %v1190
      %1192 = vmatmul.bf16.gmra.mxu0 %v1079
      %v1193 = vpop.f32.mrf.mxu0
      %v1194 = vadd.f32 %v1109, %v1193
      %v1195 = vpop.f32.mrf.mxu0
      %v1196 = vadd.f32 %v1109, %v1195
      %1197 = vmatmul.bf16.gmra.mxu0 %v1080
      %v1198 = vpop.f32.mrf.mxu0
      %v1199 = vadd.f32 %v1109, %v1198
      %v1200 = vpop.f32.mrf.mxu0
      %v1201 = vadd.f32 %v1109, %v1200
      %1202 = vmatmul.bf16.gmra.mxu0 %v1081
      %v1203 = vpop.f32.mrf.mxu0
      %v1204 = vadd.f32 %v1109, %v1203
      %v1205 = vpop.f32.mrf.mxu0
      %v1206 = vadd.f32 %v1109, %v1205
      %1207 = vmatmul.bf16.gmra.mxu0 %v1082
      %v1208 = vpop.f32.mrf.mxu0
      %v1209 = vadd.f32 %v1109, %v1208
      %v1210 = vpop.f32.mrf.mxu0
      %v1211 = vadd.f32 %v1109, %v1210
      %1212 = vmatmul.bf16.gmra.mxu0 %v1083
      %v1213 = vpop.f32.mrf.mxu0
      %v1214 = vadd.f32 %v1109, %v1213
      %v1215 = vpop.f32.mrf.mxu0
      %v1216 = vadd.f32 %v1109, %v1215
      %1217 = vmatmul.bf16.gmra.mxu0 %v1084
      %v1218 = vpop.f32.mrf.mxu0
      %v1219 = vadd.f32 %v1109, %v1218
      %v1220 = vpop.f32.mrf.mxu0
      %v1221 = vadd.f32 %v1109, %v1220
      %1222 = vmatmul.bf16.gmra.mxu0 %v1085
      %v1223 = vpop.f32.mrf.mxu0
      %v1224 = vadd.f32 %v1109, %v1223
      %v1225 = vpop.f32.mrf.mxu0
      %v1226 = vadd.f32 %v1109, %v1225
      %1227 = vmatmul.bf16.gmra.mxu0 %v1086
      %v1228 = vpop.f32.mrf.mxu0
      %v1229 = vadd.f32 %v1109, %v1228
      %v1230 = vpop.f32.mrf.mxu0
      %v1231 = vadd.f32 %v1109, %v1230
      %1232 = vmatmul.bf16.gmra.mxu0 %v1087
      %v1233 = vpop.f32.mrf.mxu0
      %v1234 = vadd.f32 %v1109, %v1233
      %v1235 = vpop.f32.mrf.mxu0
      %v1236 = vadd.f32 %v1109, %v1235
      %1237 = vmatmul.bf16.gmra.mxu0 %v1088
      %v1238 = vpop.f32.mrf.mxu0
      %v1239 = vadd.f32 %v1109, %v1238
      %v1240 = vpop.f32.mrf.mxu0
      %v1241 = vadd.f32 %v1109, %v1240
      %1242 = vmatmul.bf16.gmra.mxu0 %v1089
      %v1243 = vpop.f32.mrf.mxu0
      %v1244 = vadd.f32 %v1109, %v1243
      %v1245 = vpop.f32.mrf.mxu0
      %v1246 = vadd.f32 %v1109, %v1245
      %1247 = vdwg.mxu0
      %v1248 = vmax.f32 %v1169, 0.0
      %v1249 = vmax.f32 %v1171, 0.0
      %v1250 = vmax.f32 %v1174, 0.0
      %v1251 = vmax.f32 %v1176, 0.0
      %v1252 = vmax.f32 %v1179, 0.0
      %v1253 = vmax.f32 %v1181, 0.0
      %v1254 = vmax.f32 %v1184, 0.0
      %v1255 = vmax.f32 %v1186, 0.0
      %v1256 = vmax.f32 %v1189, 0.0
      %v1257 = vmax.f32 %v1191, 0.0
      %v1258 = vmax.f32 %v1194, 0.0
      %v1259 = vmax.f32 %v1196, 0.0
      %v1260 = vmax.f32 %v1199, 0.0
      %v1261 = vmax.f32 %v1201, 0.0
      %v1262 = vmax.f32 %v1204, 0.0
      %v1263 = vmax.f32 %v1206, 0.0
      %v1264 = vmax.f32 %v1209, 0.0
      %v1265 = vmax.f32 %v1211, 0.0
      %v1266 = vmax.f32 %v1214, 0.0
      %v1267 = vmax.f32 %v1216, 0.0
      %v1268 = vmax.f32 %v1219, 0.0
      %v1269 = vmax.f32 %v1221, 0.0
      %v1270 = vmax.f32 %v1224, 0.0
      %v1271 = vmax.f32 %v1226, 0.0
      %v1272 = vmax.f32 %v1229, 0.0
      %v1273 = vmax.f32 %v1231, 0.0
      %v1274 = vmax.f32 %v1234, 0.0
      %v1275 = vmax.f32 %v1236, 0.0
      %v1276 = vmax.f32 %v1239, 0.0
      %v1277 = vmax.f32 %v1241, 0.0
      %v1278 = vmax.f32 %v1244, 0.0
      %v1279 = vmax.f32 %v1246, 0.0
      %v1280 = vpack.c.bf16 %v1249, %v1248
      %v1281 = vpack.c.bf16 %v1251, %v1250
      %v1282 = vpack.c.bf16 %v1253, %v1252
      %v1283 = vpack.c.bf16 %v1255, %v1254
      %v1284 = vpack.c.bf16 %v1257, %v1256
      %v1285 = vpack.c.bf16 %v1259, %v1258
      %v1286 = vpack.c.bf16 %v1261, %v1260
      %v1287 = vpack.c.bf16 %v1263, %v1262
      %v1288 = vpack.c.bf16 %v1265, %v1264
      %v1289 = vpack.c.bf16 %v1267, %v1266
      %v1290 = vpack.c.bf16 %v1269, %v1268
      %v1291 = vpack.c.bf16 %v1271, %v1270
      %v1292 = vpack.c.bf16 %v1273, %v1272
      %v1293 = vpack.c.bf16 %v1275, %v1274
      %v1294 = vpack.c.bf16 %v1277, %v1276
      %v1295 = vpack.c.bf16 %v1279, %v1278
      %s1296 = scalar_lea.vmem %s2, 64
      %v1297 = vld [vmem:[%s1296] sm:$0xf]
      %v1298 = vld [vmem:[%s1296 + $0x4] sm:$0xf]
      %v1299 = vld [vmem:[%s1296 + $0x8] sm:$0xf]
      %v1300 = vld [vmem:[%s1296 + $0xc] sm:$0xf]
      %v1301 = vld [vmem:[%s1296 + $0x10] sm:$0xf]
      %v1302 = vld [vmem:[%s1296 + $0x14] sm:$0xf]
      %v1303 = vld [vmem:[%s1296 + $0x18] sm:$0xf]
      %v1304 = vld [vmem:[%s1296 + $0x1c] sm:$0xf]
      %v1305 = vld [vmem:[%s1296 + $0x20] sm:$0xf]
      %v1306 = vld [vmem:[%s1296 + $0x24] sm:$0xf]
      %v1307 = vld [vmem:[%s1296 + $0x28] sm:$0xf]
      %v1308 = vld [vmem:[%s1296 + $0x2c] sm:$0xf]
      %v1309 = vld [vmem:[%s1296 + $0x30] sm:$0xf]
      %v1310 = vld [vmem:[%s1296 + $0x34] sm:$0xf]
      %v1311 = vld [vmem:[%s1296 + $0x38] sm:$0xf]
      %v1312 = vld [vmem:[%s1296 + $0x3c] sm:$0xf]
      %s1313 = scalar_lea.vmem %s3, 2
      %v1314 = vld [vmem:[%s1313] sm:$0x1]
      %v1316 = vperm.slane %v1314, 0
      %v1334 = vunpack.c.l.b16 %v1297
      %v1335 = vunpack.c.l.b16 %v1298
      %v1336 = vunpack.c.l.b16 %v1299
      %v1337 = vunpack.c.l.b16 %v1300
      %v1338 = vunpack.c.l.b16 %v1301
      %v1339 = vunpack.c.l.b16 %v1302
      %v1340 = vunpack.c.l.b16 %v1303
      %v1341 = vunpack.c.l.b16 %v1304
      %v1342 = vunpack.c.l.b16 %v1305
      %v1343 = vunpack.c.l.b16 %v1306
      %v1344 = vunpack.c.l.b16 %v1307
      %v1345 = vunpack.c.l.b16 %v1308
      %v1346 = vunpack.c.l.b16 %v1309
      %v1347 = vunpack.c.l.b16 %v1310
      %v1348 = vunpack.c.l.b16 %v1311
      %v1349 = vunpack.c.l.b16 %v1312
      %v1350 = vpack.c.b16 %v1335, %v1334
      %v1351 = vpack.c.b16 %v1337, %v1336
      %v1352 = vpack.c.b16 %v1339, %v1338
      %v1353 = vpack.c.b16 %v1341, %v1340
      %v1354 = vpack.c.b16 %v1343, %v1342
      %v1355 = vpack.c.b16 %v1345, %v1344
      %v1356 = vpack.c.b16 %v1347, %v1346
      %v1357 = vpack.c.b16 %v1349, %v1348
      %1366 = vmatpush.bf16.msra.mxu0 %v1357
      %1367 = vmatpush.bf16.msra.mxu0 %v1356
      %1368 = vmatpush.bf16.msra.mxu0 %v1355
      %1369 = vmatpush.bf16.msra.mxu0 %v1354
      %1370 = vmatpush.bf16.msra.mxu0 %v1353
      %1371 = vmatpush.bf16.msra.mxu0 %v1352
      %1372 = vmatpush.bf16.msra.mxu0 %v1351
      %1373 = vmatpush.bf16.msra.mxu0 %v1350
      %1374 = vmatmul.bf16.gmra.mxu0 %v1280
      %v1375 = vpop.f32.mrf.mxu0
      %v1376 = vadd.f32 %v1316, %v1375
      %v1377 = vpop.f32.mrf.mxu0
      %v1378 = vadd.f32 %v1316, %v1377
      %1379 = vmatmul.bf16.gmra.mxu0 %v1281
      %v1380 = vpop.f32.mrf.mxu0
      %v1381 = vadd.f32 %v1316, %v1380
      %v1382 = vpop.f32.mrf.mxu0
      %v1383 = vadd.f32 %v1316, %v1382
      %1384 = vmatmul.bf16.gmra.mxu0 %v1282
      %v1385 = vpop.f32.mrf.mxu0
      %v1386 = vadd.f32 %v1316, %v1385
      %v1387 = vpop.f32.mrf.mxu0
      %v1388 = vadd.f32 %v1316, %v1387
      %1389 = vmatmul.bf16.gmra.mxu0 %v1283
      %v1390 = vpop.f32.mrf.mxu0
      %v1391 = vadd.f32 %v1316, %v1390
      %v1392 = vpop.f32.mrf.mxu0
      %v1393 = vadd.f32 %v1316, %v1392
      %1394 = vmatmul.bf16.gmra.mxu0 %v1284
      %v1395 = vpop.f32.mrf.mxu0
      %v1396 = vadd.f32 %v1316, %v1395
      %v1397 = vpop.f32.mrf.mxu0
      %v1398 = vadd.f32 %v1316, %v1397
      %1399 = vmatmul.bf16.gmra.mxu0 %v1285
      %v1400 = vpop.f32.mrf.mxu0
      %v1401 = vadd.f32 %v1316, %v1400
      %v1402 = vpop.f32.mrf.mxu0
      %v1403 = vadd.f32 %v1316, %v1402
      %1404 = vmatmul.bf16.gmra.mxu0 %v1286
      %v1405 = vpop.f32.mrf.mxu0
      %v1406 = vadd.f32 %v1316, %v1405
      %v1407 = vpop.f32.mrf.mxu0
      %v1408 = vadd.f32 %v1316, %v1407
      %1409 = vmatmul.bf16.gmra.mxu0 %v1287
      %v1410 = vpop.f32.mrf.mxu0
      %v1411 = vadd.f32 %v1316, %v1410
      %v1412 = vpop.f32.mrf.mxu0
      %v1413 = vadd.f32 %v1316, %v1412
      %1414 = vmatmul.bf16.gmra.mxu0 %v1288
      %v1415 = vpop.f32.mrf.mxu0
      %v1416 = vadd.f32 %v1316, %v1415
      %v1417 = vpop.f32.mrf.mxu0
      %v1418 = vadd.f32 %v1316, %v1417
      %1419 = vmatmul.bf16.gmra.mxu0 %v1289
      %v1420 = vpop.f32.mrf.mxu0
      %v1421 = vadd.f32 %v1316, %v1420
      %v1422 = vpop.f32.mrf.mxu0
      %v1423 = vadd.f32 %v1316, %v1422
      %1424 = vmatmul.bf16.gmra.mxu0 %v1290
      %v1425 = vpop.f32.mrf.mxu0
      %v1426 = vadd.f32 %v1316, %v1425
      %v1427 = vpop.f32.mrf.mxu0
      %v1428 = vadd.f32 %v1316, %v1427
      %1429 = vmatmul.bf16.gmra.mxu0 %v1291
      %v1430 = vpop.f32.mrf.mxu0
      %v1431 = vadd.f32 %v1316, %v1430
      %v1432 = vpop.f32.mrf.mxu0
      %v1433 = vadd.f32 %v1316, %v1432
      %1434 = vmatmul.bf16.gmra.mxu0 %v1292
      %v1435 = vpop.f32.mrf.mxu0
      %v1436 = vadd.f32 %v1316, %v1435
      %v1437 = vpop.f32.mrf.mxu0
      %v1438 = vadd.f32 %v1316, %v1437
      %1439 = vmatmul.bf16.gmra.mxu0 %v1293
      %v1440 = vpop.f32.mrf.mxu0
      %v1441 = vadd.f32 %v1316, %v1440
      %v1442 = vpop.f32.mrf.mxu0
      %v1443 = vadd.f32 %v1316, %v1442
      %1444 = vmatmul.bf16.gmra.mxu0 %v1294
      %v1445 = vpop.f32.mrf.mxu0
      %v1446 = vadd.f32 %v1316, %v1445
      %v1447 = vpop.f32.mrf.mxu0
      %v1448 = vadd.f32 %v1316, %v1447
      %1449 = vmatmul.bf16.gmra.mxu0 %v1295
      %v1450 = vpop.f32.mrf.mxu0
      %v1451 = vadd.f32 %v1316, %v1450
      %v1452 = vpop.f32.mrf.mxu0
      %v1453 = vadd.f32 %v1316, %v1452
      %1454 = vdwg.mxu0
      %v1455 = vmax.f32 %v1376, 0.0
      %v1456 = vmax.f32 %v1378, 0.0
      %v1457 = vmax.f32 %v1381, 0.0
      %v1458 = vmax.f32 %v1383, 0.0
      %v1459 = vmax.f32 %v1386, 0.0
      %v1460 = vmax.f32 %v1388, 0.0
      %v1461 = vmax.f32 %v1391, 0.0
      %v1462 = vmax.f32 %v1393, 0.0
      %v1463 = vmax.f32 %v1396, 0.0
      %v1464 = vmax.f32 %v1398, 0.0
      %v1465 = vmax.f32 %v1401, 0.0
      %v1466 = vmax.f32 %v1403, 0.0
      %v1467 = vmax.f32 %v1406, 0.0
      %v1468 = vmax.f32 %v1408, 0.0
      %v1469 = vmax.f32 %v1411, 0.0
      %v1470 = vmax.f32 %v1413, 0.0
      %v1471 = vmax.f32 %v1416, 0.0
      %v1472 = vmax.f32 %v1418, 0.0
      %v1473 = vmax.f32 %v1421, 0.0
      %v1474 = vmax.f32 %v1423, 0.0
      %v1475 = vmax.f32 %v1426, 0.0
      %v1476 = vmax.f32 %v1428, 0.0
      %v1477 = vmax.f32 %v1431, 0.0
      %v1478 = vmax.f32 %v1433, 0.0
      %v1479 = vmax.f32 %v1436, 0.0
      %v1480 = vmax.f32 %v1438, 0.0
      %v1481 = vmax.f32 %v1441, 0.0
      %v1482 = vmax.f32 %v1443, 0.0
      %v1483 = vmax.f32 %v1446, 0.0
      %v1484 = vmax.f32 %v1448, 0.0
      %v1485 = vmax.f32 %v1451, 0.0
      %v1486 = vmax.f32 %v1453, 0.0
      %v1487 = vpack.c.bf16 %v1456, %v1455
      %v1488 = vpack.c.bf16 %v1458, %v1457
      %v1489 = vpack.c.bf16 %v1460, %v1459
      %v1490 = vpack.c.bf16 %v1462, %v1461
      %v1491 = vpack.c.bf16 %v1464, %v1463
      %v1492 = vpack.c.bf16 %v1466, %v1465
      %v1493 = vpack.c.bf16 %v1468, %v1467
      %v1494 = vpack.c.bf16 %v1470, %v1469
      %v1495 = vpack.c.bf16 %v1472, %v1471
      %v1496 = vpack.c.bf16 %v1474, %v1473
      %v1497 = vpack.c.bf16 %v1476, %v1475
      %v1498 = vpack.c.bf16 %v1478, %v1477
      %v1499 = vpack.c.bf16 %v1480, %v1479
      %v1500 = vpack.c.bf16 %v1482, %v1481
      %v1501 = vpack.c.bf16 %v1484, %v1483
      %v1502 = vpack.c.bf16 %v1486, %v1485
      %s1503 = scalar_lea.vmem %s2, 128
      %v1504 = vld [vmem:[%s1503] sm:$0xf]
      %v1505 = vld [vmem:[%s1503 + $0x4] sm:$0xf]
      %v1506 = vld [vmem:[%s1503 + $0x8] sm:$0xf]
      %v1507 = vld [vmem:[%s1503 + $0xc] sm:$0xf]
      %v1508 = vld [vmem:[%s1503 + $0x10] sm:$0xf]
      %v1509 = vld [vmem:[%s1503 + $0x14] sm:$0xf]
      %v1510 = vld [vmem:[%s1503 + $0x18] sm:$0xf]
      %v1511 = vld [vmem:[%s1503 + $0x1c] sm:$0xf]
      %v1512 = vld [vmem:[%s1503 + $0x20] sm:$0xf]
      %v1513 = vld [vmem:[%s1503 + $0x24] sm:$0xf]
      %v1514 = vld [vmem:[%s1503 + $0x28] sm:$0xf]
      %v1515 = vld [vmem:[%s1503 + $0x2c] sm:$0xf]
      %v1516 = vld [vmem:[%s1503 + $0x30] sm:$0xf]
      %v1517 = vld [vmem:[%s1503 + $0x34] sm:$0xf]
      %v1518 = vld [vmem:[%s1503 + $0x38] sm:$0xf]
      %v1519 = vld [vmem:[%s1503 + $0x3c] sm:$0xf]
      %s1520 = scalar_lea.vmem %s3, 3
      %v1521 = vld [vmem:[%s1520] sm:$0x1]
      %v1523 = vperm.slane %v1521, 0
      %v1541 = vunpack.c.l.b16 %v1504
      %v1542 = vunpack.c.l.b16 %v1505
      %v1543 = vunpack.c.l.b16 %v1506
      %v1544 = vunpack.c.l.b16 %v1507
      %v1545 = vunpack.c.l.b16 %v1508
      %v1546 = vunpack.c.l.b16 %v1509
      %v1547 = vunpack.c.l.b16 %v1510
      %v1548 = vunpack.c.l.b16 %v1511
      %v1549 = vunpack.c.l.b16 %v1512
      %v1550 = vunpack.c.l.b16 %v1513
      %v1551 = vunpack.c.l.b16 %v1514
      %v1552 = vunpack.c.l.b16 %v1515
      %v1553 = vunpack.c.l.b16 %v1516
      %v1554 = vunpack.c.l.b16 %v1517
      %v1555 = vunpack.c.l.b16 %v1518
      %v1556 = vunpack.c.l.b16 %v1519
      %v1557 = vpack.c.b16 %v1542, %v1541
      %v1558 = vpack.c.b16 %v1544, %v1543
      %v1559 = vpack.c.b16 %v1546, %v1545
      %v1560 = vpack.c.b16 %v1548, %v1547
      %v1561 = vpack.c.b16 %v1550, %v1549
      %v1562 = vpack.c.b16 %v1552, %v1551
      %v1563 = vpack.c.b16 %v1554, %v1553
      %v1564 = vpack.c.b16 %v1556, %v1555
      %1573 = vmatpush.bf16.msra.mxu0 %v1564
      %1574 = vmatpush.bf16.msra.mxu0 %v1563
      %1575 = vmatpush.bf16.msra.mxu0 %v1562
      %1576 = vmatpush.bf16.msra.mxu0 %v1561
      %1577 = vmatpush.bf16.msra.mxu0 %v1560
      %1578 = vmatpush.bf16.msra.mxu0 %v1559
      %1579 = vmatpush.bf16.msra.mxu0 %v1558
      %1580 = vmatpush.bf16.msra.mxu0 %v1557
      %1581 = vmatmul.bf16.gmra.mxu0 %v1487
      %v1582 = vpop.f32.mrf.mxu0
      %v1583 = vadd.f32 %v1523, %v1582
      %v1584 = vpop.f32.mrf.mxu0
      %v1585 = vadd.f32 %v1523, %v1584
      %1586 = vmatmul.bf16.gmra.mxu0 %v1488
      %v1587 = vpop.f32.mrf.mxu0
      %v1588 = vadd.f32 %v1523, %v1587
      %v1589 = vpop.f32.mrf.mxu0
      %v1590 = vadd.f32 %v1523, %v1589
      %1591 = vmatmul.bf16.gmra.mxu0 %v1489
      %v1592 = vpop.f32.mrf.mxu0
      %v1593 = vadd.f32 %v1523, %v1592
      %v1594 = vpop.f32.mrf.mxu0
      %v1595 = vadd.f32 %v1523, %v1594
      %1596 = vmatmul.bf16.gmra.mxu0 %v1490
      %v1597 = vpop.f32.mrf.mxu0
      %v1598 = vadd.f32 %v1523, %v1597
      %v1599 = vpop.f32.mrf.mxu0
      %v1600 = vadd.f32 %v1523, %v1599
      %1601 = vmatmul.bf16.gmra.mxu0 %v1491
      %v1602 = vpop.f32.mrf.mxu0
      %v1603 = vadd.f32 %v1523, %v1602
      %v1604 = vpop.f32.mrf.mxu0
      %v1605 = vadd.f32 %v1523, %v1604
      %1606 = vmatmul.bf16.gmra.mxu0 %v1492
      %v1607 = vpop.f32.mrf.mxu0
      %v1608 = vadd.f32 %v1523, %v1607
      %v1609 = vpop.f32.mrf.mxu0
      %v1610 = vadd.f32 %v1523, %v1609
      %1611 = vmatmul.bf16.gmra.mxu0 %v1493
      %v1612 = vpop.f32.mrf.mxu0
      %v1613 = vadd.f32 %v1523, %v1612
      %v1614 = vpop.f32.mrf.mxu0
      %v1615 = vadd.f32 %v1523, %v1614
      %1616 = vmatmul.bf16.gmra.mxu0 %v1494
      %v1617 = vpop.f32.mrf.mxu0
      %v1618 = vadd.f32 %v1523, %v1617
      %v1619 = vpop.f32.mrf.mxu0
      %v1620 = vadd.f32 %v1523, %v1619
      %1621 = vmatmul.bf16.gmra.mxu0 %v1495
      %v1622 = vpop.f32.mrf.mxu0
      %v1623 = vadd.f32 %v1523, %v1622
      %v1624 = vpop.f32.mrf.mxu0
      %v1625 = vadd.f32 %v1523, %v1624
      %1626 = vmatmul.bf16.gmra.mxu0 %v1496
      %v1627 = vpop.f32.mrf.mxu0
      %v1628 = vadd.f32 %v1523, %v1627
      %v1629 = vpop.f32.mrf.mxu0
      %v1630 = vadd.f32 %v1523, %v1629
      %1631 = vmatmul.bf16.gmra.mxu0 %v1497
      %v1632 = vpop.f32.mrf.mxu0
      %v1633 = vadd.f32 %v1523, %v1632
      %v1634 = vpop.f32.mrf.mxu0
      %v1635 = vadd.f32 %v1523, %v1634
      %1636 = vmatmul.bf16.gmra.mxu0 %v1498
      %v1637 = vpop.f32.mrf.mxu0
      %v1638 = vadd.f32 %v1523, %v1637
      %v1639 = vpop.f32.mrf.mxu0
      %v1640 = vadd.f32 %v1523, %v1639
      %1641 = vmatmul.bf16.gmra.mxu0 %v1499
      %v1642 = vpop.f32.mrf.mxu0
      %v1643 = vadd.f32 %v1523, %v1642
      %v1644 = vpop.f32.mrf.mxu0
      %v1645 = vadd.f32 %v1523, %v1644
      %1646 = vmatmul.bf16.gmra.mxu0 %v1500
      %v1647 = vpop.f32.mrf.mxu0
      %v1648 = vadd.f32 %v1523, %v1647
      %v1649 = vpop.f32.mrf.mxu0
      %v1650 = vadd.f32 %v1523, %v1649
      %1651 = vmatmul.bf16.gmra.mxu0 %v1501
      %v1652 = vpop.f32.mrf.mxu0
      %v1653 = vadd.f32 %v1523, %v1652
      %v1654 = vpop.f32.mrf.mxu0
      %v1655 = vadd.f32 %v1523, %v1654
      %1656 = vmatmul.bf16.gmra.mxu0 %v1502
      %v1657 = vpop.f32.mrf.mxu0
      %v1658 = vadd.f32 %v1523, %v1657
      %v1659 = vpop.f32.mrf.mxu0
      %v1660 = vadd.f32 %v1523, %v1659
      %1661 = vdwg.mxu0
      %v1662 = vmax.f32 %v1583, 0.0
      %v1663 = vmax.f32 %v1585, 0.0
      %v1664 = vmax.f32 %v1588, 0.0
      %v1665 = vmax.f32 %v1590, 0.0
      %v1666 = vmax.f32 %v1593, 0.0
      %v1667 = vmax.f32 %v1595, 0.0
      %v1668 = vmax.f32 %v1598, 0.0
      %v1669 = vmax.f32 %v1600, 0.0
      %v1670 = vmax.f32 %v1603, 0.0
      %v1671 = vmax.f32 %v1605, 0.0
      %v1672 = vmax.f32 %v1608, 0.0
      %v1673 = vmax.f32 %v1610, 0.0
      %v1674 = vmax.f32 %v1613, 0.0
      %v1675 = vmax.f32 %v1615, 0.0
      %v1676 = vmax.f32 %v1618, 0.0
      %v1677 = vmax.f32 %v1620, 0.0
      %v1678 = vmax.f32 %v1623, 0.0
      %v1679 = vmax.f32 %v1625, 0.0
      %v1680 = vmax.f32 %v1628, 0.0
      %v1681 = vmax.f32 %v1630, 0.0
      %v1682 = vmax.f32 %v1633, 0.0
      %v1683 = vmax.f32 %v1635, 0.0
      %v1684 = vmax.f32 %v1638, 0.0
      %v1685 = vmax.f32 %v1640, 0.0
      %v1686 = vmax.f32 %v1643, 0.0
      %v1687 = vmax.f32 %v1645, 0.0
      %v1688 = vmax.f32 %v1648, 0.0
      %v1689 = vmax.f32 %v1650, 0.0
      %v1690 = vmax.f32 %v1653, 0.0
      %v1691 = vmax.f32 %v1655, 0.0
      %v1692 = vmax.f32 %v1658, 0.0
      %v1693 = vmax.f32 %v1660, 0.0
      %v1694 = vpack.c.bf16 %v1663, %v1662
      %v1695 = vpack.c.bf16 %v1665, %v1664
      %v1696 = vpack.c.bf16 %v1667, %v1666
      %v1697 = vpack.c.bf16 %v1669, %v1668
      %v1698 = vpack.c.bf16 %v1671, %v1670
      %v1699 = vpack.c.bf16 %v1673, %v1672
      %v1700 = vpack.c.bf16 %v1675, %v1674
      %v1701 = vpack.c.bf16 %v1677, %v1676
      %v1702 = vpack.c.bf16 %v1679, %v1678
      %v1703 = vpack.c.bf16 %v1681, %v1680
      %v1704 = vpack.c.bf16 %v1683, %v1682
      %v1705 = vpack.c.bf16 %v1685, %v1684
      %v1706 = vpack.c.bf16 %v1687, %v1686
      %v1707 = vpack.c.bf16 %v1689, %v1688
      %v1708 = vpack.c.bf16 %v1691, %v1690
      %v1709 = vpack.c.bf16 %v1693, %v1692
      %s1710 = scalar_lea.vmem %s2, 192
      %v1711 = vld [vmem:[%s1710] sm:$0xf]
      %v1712 = vld [vmem:[%s1710 + $0x4] sm:$0xf]
      %v1713 = vld [vmem:[%s1710 + $0x8] sm:$0xf]
      %v1714 = vld [vmem:[%s1710 + $0xc] sm:$0xf]
      %v1715 = vld [vmem:[%s1710 + $0x10] sm:$0xf]
      %v1716 = vld [vmem:[%s1710 + $0x14] sm:$0xf]
      %v1717 = vld [vmem:[%s1710 + $0x18] sm:$0xf]
      %v1718 = vld [vmem:[%s1710 + $0x1c] sm:$0xf]
      %v1719 = vld [vmem:[%s1710 + $0x20] sm:$0xf]
      %v1720 = vld [vmem:[%s1710 + $0x24] sm:$0xf]
      %v1721 = vld [vmem:[%s1710 + $0x28] sm:$0xf]
      %v1722 = vld [vmem:[%s1710 + $0x2c] sm:$0xf]
      %v1723 = vld [vmem:[%s1710 + $0x30] sm:$0xf]
      %v1724 = vld [vmem:[%s1710 + $0x34] sm:$0xf]
      %v1725 = vld [vmem:[%s1710 + $0x38] sm:$0xf]
      %v1726 = vld [vmem:[%s1710 + $0x3c] sm:$0xf]
      %s1727 = scalar_lea.vmem %s3, 4
      %v1728 = vld [vmem:[%s1727] sm:$0x1]
      %v1730 = vperm.slane %v1728, 0
      %v1748 = vunpack.c.l.b16 %v1711
      %v1749 = vunpack.c.l.b16 %v1712
      %v1750 = vunpack.c.l.b16 %v1713
      %v1751 = vunpack.c.l.b16 %v1714
      %v1752 = vunpack.c.l.b16 %v1715
      %v1753 = vunpack.c.l.b16 %v1716
      %v1754 = vunpack.c.l.b16 %v1717
      %v1755 = vunpack.c.l.b16 %v1718
      %v1756 = vunpack.c.l.b16 %v1719
      %v1757 = vunpack.c.l.b16 %v1720
      %v1758 = vunpack.c.l.b16 %v1721
      %v1759 = vunpack.c.l.b16 %v1722
      %v1760 = vunpack.c.l.b16 %v1723
      %v1761 = vunpack.c.l.b16 %v1724
      %v1762 = vunpack.c.l.b16 %v1725
      %v1763 = vunpack.c.l.b16 %v1726
      %v1764 = vpack.c.b16 %v1749, %v1748
      %v1765 = vpack.c.b16 %v1751, %v1750
      %v1766 = vpack.c.b16 %v1753, %v1752
      %v1767 = vpack.c.b16 %v1755, %v1754
      %v1768 = vpack.c.b16 %v1757, %v1756
      %v1769 = vpack.c.b16 %v1759, %v1758
      %v1770 = vpack.c.b16 %v1761, %v1760
      %v1771 = vpack.c.b16 %v1763, %v1762
      %1780 = vmatpush.bf16.msra.mxu0 %v1771
      %1781 = vmatpush.bf16.msra.mxu0 %v1770
      %1782 = vmatpush.bf16.msra.mxu0 %v1769
      %1783 = vmatpush.bf16.msra.mxu0 %v1768
      %1784 = vmatpush.bf16.msra.mxu0 %v1767
      %1785 = vmatpush.bf16.msra.mxu0 %v1766
      %1786 = vmatpush.bf16.msra.mxu0 %v1765
      %1787 = vmatpush.bf16.msra.mxu0 %v1764
      %1788 = vmatmul.bf16.gmra.mxu0 %v1694
      %v1789 = vpop.f32.mrf.mxu0
      %v1790 = vadd.f32 %v1730, %v1789
      %v1791 = vpop.f32.mrf.mxu0
      %v1792 = vadd.f32 %v1730, %v1791
      %1793 = vmatmul.bf16.gmra.mxu0 %v1695
      %v1794 = vpop.f32.mrf.mxu0
      %v1795 = vadd.f32 %v1730, %v1794
      %v1796 = vpop.f32.mrf.mxu0
      %v1797 = vadd.f32 %v1730, %v1796
      %1798 = vmatmul.bf16.gmra.mxu0 %v1696
      %v1799 = vpop.f32.mrf.mxu0
      %v1800 = vadd.f32 %v1730, %v1799
      %v1801 = vpop.f32.mrf.mxu0
      %v1802 = vadd.f32 %v1730, %v1801
      %1803 = vmatmul.bf16.gmra.mxu0 %v1697
      %v1804 = vpop.f32.mrf.mxu0
      %v1805 = vadd.f32 %v1730, %v1804
      %v1806 = vpop.f32.mrf.mxu0
      %v1807 = vadd.f32 %v1730, %v1806
      %1808 = vmatmul.bf16.gmra.mxu0 %v1698
      %v1809 = vpop.f32.mrf.mxu0
      %v1810 = vadd.f32 %v1730, %v1809
      %v1811 = vpop.f32.mrf.mxu0
      %v1812 = vadd.f32 %v1730, %v1811
      %1813 = vmatmul.bf16.gmra.mxu0 %v1699
      %v1814 = vpop.f32.mrf.mxu0
      %v1815 = vadd.f32 %v1730, %v1814
      %v1816 = vpop.f32.mrf.mxu0
      %v1817 = vadd.f32 %v1730, %v1816
      %1818 = vmatmul.bf16.gmra.mxu0 %v1700
      %v1819 = vpop.f32.mrf.mxu0
      %v1820 = vadd.f32 %v1730, %v1819
      %v1821 = vpop.f32.mrf.mxu0
      %v1822 = vadd.f32 %v1730, %v1821
      %1823 = vmatmul.bf16.gmra.mxu0 %v1701
      %v1824 = vpop.f32.mrf.mxu0
      %v1825 = vadd.f32 %v1730, %v1824
      %v1826 = vpop.f32.mrf.mxu0
      %v1827 = vadd.f32 %v1730, %v1826
      %1828 = vmatmul.bf16.gmra.mxu0 %v1702
      %v1829 = vpop.f32.mrf.mxu0
      %v1830 = vadd.f32 %v1730, %v1829
      %v1831 = vpop.f32.mrf.mxu0
      %v1832 = vadd.f32 %v1730, %v1831
      %1833 = vmatmul.bf16.gmra.mxu0 %v1703
      %v1834 = vpop.f32.mrf.mxu0
      %v1835 = vadd.f32 %v1730, %v1834
      %v1836 = vpop.f32.mrf.mxu0
      %v1837 = vadd.f32 %v1730, %v1836
      %1838 = vmatmul.bf16.gmra.mxu0 %v1704
      %v1839 = vpop.f32.mrf.mxu0
      %v1840 = vadd.f32 %v1730, %v1839
      %v1841 = vpop.f32.mrf.mxu0
      %v1842 = vadd.f32 %v1730, %v1841
      %1843 = vmatmul.bf16.gmra.mxu0 %v1705
      %v1844 = vpop.f32.mrf.mxu0
      %v1845 = vadd.f32 %v1730, %v1844
      %v1846 = vpop.f32.mrf.mxu0
      %v1847 = vadd.f32 %v1730, %v1846
      %1848 = vmatmul.bf16.gmra.mxu0 %v1706
      %v1849 = vpop.f32.mrf.mxu0
      %v1850 = vadd.f32 %v1730, %v1849
      %v1851 = vpop.f32.mrf.mxu0
      %v1852 = vadd.f32 %v1730, %v1851
      %1853 = vmatmul.bf16.gmra.mxu0 %v1707
      %v1854 = vpop.f32.mrf.mxu0
      %v1855 = vadd.f32 %v1730, %v1854
      %v1856 = vpop.f32.mrf.mxu0
      %v1857 = vadd.f32 %v1730, %v1856
      %1858 = vmatmul.bf16.gmra.mxu0 %v1708
      %v1859 = vpop.f32.mrf.mxu0
      %v1860 = vadd.f32 %v1730, %v1859
      %v1861 = vpop.f32.mrf.mxu0
      %v1862 = vadd.f32 %v1730, %v1861
      %1863 = vmatmul.bf16.gmra.mxu0 %v1709
      %v1864 = vpop.f32.mrf.mxu0
      %v1865 = vadd.f32 %v1730, %v1864
      %v1866 = vpop.f32.mrf.mxu0
      %v1867 = vadd.f32 %v1730, %v1866
      %1868 = vdwg.mxu0
      %v1869 = vmax.f32 %v1790, 0.0
      %v1870 = vmax.f32 %v1792, 0.0
      %v1871 = vmax.f32 %v1795, 0.0
      %v1872 = vmax.f32 %v1797, 0.0
      %v1873 = vmax.f32 %v1800, 0.0
      %v1874 = vmax.f32 %v1802, 0.0
      %v1875 = vmax.f32 %v1805, 0.0
      %v1876 = vmax.f32 %v1807, 0.0
      %v1877 = vmax.f32 %v1810, 0.0
      %v1878 = vmax.f32 %v1812, 0.0
      %v1879 = vmax.f32 %v1815, 0.0
      %v1880 = vmax.f32 %v1817, 0.0
      %v1881 = vmax.f32 %v1820, 0.0
      %v1882 = vmax.f32 %v1822, 0.0
      %v1883 = vmax.f32 %v1825, 0.0
      %v1884 = vmax.f32 %v1827, 0.0
      %v1885 = vmax.f32 %v1830, 0.0
      %v1886 = vmax.f32 %v1832, 0.0
      %v1887 = vmax.f32 %v1835, 0.0
      %v1888 = vmax.f32 %v1837, 0.0
      %v1889 = vmax.f32 %v1840, 0.0
      %v1890 = vmax.f32 %v1842, 0.0
      %v1891 = vmax.f32 %v1845, 0.0
      %v1892 = vmax.f32 %v1847, 0.0
      %v1893 = vmax.f32 %v1850, 0.0
      %v1894 = vmax.f32 %v1852, 0.0
      %v1895 = vmax.f32 %v1855, 0.0
      %v1896 = vmax.f32 %v1857, 0.0
      %v1897 = vmax.f32 %v1860, 0.0
      %v1898 = vmax.f32 %v1862, 0.0
      %v1899 = vmax.f32 %v1865, 0.0
      %v1900 = vmax.f32 %v1867, 0.0
      %v1901 = vpack.c.bf16 %v1870, %v1869
      %v1902 = vpack.c.bf16 %v1872, %v1871
      %v1903 = vpack.c.bf16 %v1874, %v1873
      %v1904 = vpack.c.bf16 %v1876, %v1875
      %v1905 = vpack.c.bf16 %v1878, %v1877
      %v1906 = vpack.c.bf16 %v1880, %v1879
      %v1907 = vpack.c.bf16 %v1882, %v1881
      %v1908 = vpack.c.bf16 %v1884, %v1883
      %v1909 = vpack.c.bf16 %v1886, %v1885
      %v1910 = vpack.c.bf16 %v1888, %v1887
      %v1911 = vpack.c.bf16 %v1890, %v1889
      %v1912 = vpack.c.bf16 %v1892, %v1891
      %v1913 = vpack.c.bf16 %v1894, %v1893
      %v1914 = vpack.c.bf16 %v1896, %v1895
      %v1915 = vpack.c.bf16 %v1898, %v1897
      %v1916 = vpack.c.bf16 %v1900, %v1899
      %s1917 = scalar_lea.vmem %s2, 256
      %v1918 = vld [vmem:[%s1917] sm:$0xf]
      %v1919 = vld [vmem:[%s1917 + $0x4] sm:$0xf]
      %v1920 = vld [vmem:[%s1917 + $0x8] sm:$0xf]
      %v1921 = vld [vmem:[%s1917 + $0xc] sm:$0xf]
      %v1922 = vld [vmem:[%s1917 + $0x10] sm:$0xf]
      %v1923 = vld [vmem:[%s1917 + $0x14] sm:$0xf]
      %v1924 = vld [vmem:[%s1917 + $0x18] sm:$0xf]
      %v1925 = vld [vmem:[%s1917 + $0x1c] sm:$0xf]
      %v1926 = vld [vmem:[%s1917 + $0x20] sm:$0xf]
      %v1927 = vld [vmem:[%s1917 + $0x24] sm:$0xf]
      %v1928 = vld [vmem:[%s1917 + $0x28] sm:$0xf]
      %v1929 = vld [vmem:[%s1917 + $0x2c] sm:$0xf]
      %v1930 = vld [vmem:[%s1917 + $0x30] sm:$0xf]
      %v1931 = vld [vmem:[%s1917 + $0x34] sm:$0xf]
      %v1932 = vld [vmem:[%s1917 + $0x38] sm:$0xf]
      %v1933 = vld [vmem:[%s1917 + $0x3c] sm:$0xf]
      %s1934 = scalar_lea.vmem %s3, 5
      %v1935 = vld [vmem:[%s1934] sm:$0x1]
      %v1937 = vperm.slane %v1935, 0
      %v1955 = vunpack.c.l.b16 %v1918
      %v1956 = vunpack.c.l.b16 %v1919
      %v1957 = vunpack.c.l.b16 %v1920
      %v1958 = vunpack.c.l.b16 %v1921
      %v1959 = vunpack.c.l.b16 %v1922
      %v1960 = vunpack.c.l.b16 %v1923
      %v1961 = vunpack.c.l.b16 %v1924
      %v1962 = vunpack.c.l.b16 %v1925
      %v1963 = vunpack.c.l.b16 %v1926
      %v1964 = vunpack.c.l.b16 %v1927
      %v1965 = vunpack.c.l.b16 %v1928
      %v1966 = vunpack.c.l.b16 %v1929
      %v1967 = vunpack.c.l.b16 %v1930
      %v1968 = vunpack.c.l.b16 %v1931
      %v1969 = vunpack.c.l.b16 %v1932
      %v1970 = vunpack.c.l.b16 %v1933
      %v1971 = vpack.c.b16 %v1956, %v1955
      %v1972 = vpack.c.b16 %v1958, %v1957
      %v1973 = vpack.c.b16 %v1960, %v1959
      %v1974 = vpack.c.b16 %v1962, %v1961
      %v1975 = vpack.c.b16 %v1964, %v1963
      %v1976 = vpack.c.b16 %v1966, %v1965
      %v1977 = vpack.c.b16 %v1968, %v1967
      %v1978 = vpack.c.b16 %v1970, %v1969
      %1987 = vmatpush.bf16.msra.mxu0 %v1978
      %1988 = vmatpush.bf16.msra.mxu0 %v1977
      %1989 = vmatpush.bf16.msra.mxu0 %v1976
      %1990 = vmatpush.bf16.msra.mxu0 %v1975
      %1991 = vmatpush.bf16.msra.mxu0 %v1974
      %1992 = vmatpush.bf16.msra.mxu0 %v1973
      %1993 = vmatpush.bf16.msra.mxu0 %v1972
      %1994 = vmatpush.bf16.msra.mxu0 %v1971
      %1995 = vmatmul.bf16.gmra.mxu0 %v1901
      %v1996 = vpop.f32.mrf.mxu0
      %v1997 = vadd.f32 %v1937, %v1996
      %v1998 = vpop.f32.mrf.mxu0
      %v1999 = vadd.f32 %v1937, %v1998
      %2000 = vmatmul.bf16.gmra.mxu0 %v1902
      %v2001 = vpop.f32.mrf.mxu0
      %v2002 = vadd.f32 %v1937, %v2001
      %v2003 = vpop.f32.mrf.mxu0
      %v2004 = vadd.f32 %v1937, %v2003
      %2005 = vmatmul.bf16.gmra.mxu0 %v1903
      %v2006 = vpop.f32.mrf.mxu0
      %v2007 = vadd.f32 %v1937, %v2006
      %v2008 = vpop.f32.mrf.mxu0
      %v2009 = vadd.f32 %v1937, %v2008
      %2010 = vmatmul.bf16.gmra.mxu0 %v1904
      %v2011 = vpop.f32.mrf.mxu0
      %v2012 = vadd.f32 %v1937, %v2011
      %v2013 = vpop.f32.mrf.mxu0
      %v2014 = vadd.f32 %v1937, %v2013
      %2015 = vmatmul.bf16.gmra.mxu0 %v1905
      %v2016 = vpop.f32.mrf.mxu0
      %v2017 = vadd.f32 %v1937, %v2016
      %v2018 = vpop.f32.mrf.mxu0
      %v2019 = vadd.f32 %v1937, %v2018
      %2020 = vmatmul.bf16.gmra.mxu0 %v1906
      %v2021 = vpop.f32.mrf.mxu0
      %v2022 = vadd.f32 %v1937, %v2021
      %v2023 = vpop.f32.mrf.mxu0
      %v2024 = vadd.f32 %v1937, %v2023
      %2025 = vmatmul.bf16.gmra.mxu0 %v1907
      %v2026 = vpop.f32.mrf.mxu0
      %v2027 = vadd.f32 %v1937, %v2026
      %v2028 = vpop.f32.mrf.mxu0
      %v2029 = vadd.f32 %v1937, %v2028
      %2030 = vmatmul.bf16.gmra.mxu0 %v1908
      %v2031 = vpop.f32.mrf.mxu0
      %v2032 = vadd.f32 %v1937, %v2031
      %v2033 = vpop.f32.mrf.mxu0
      %v2034 = vadd.f32 %v1937, %v2033
      %2035 = vmatmul.bf16.gmra.mxu0 %v1909
      %v2036 = vpop.f32.mrf.mxu0
      %v2037 = vadd.f32 %v1937, %v2036
      %v2038 = vpop.f32.mrf.mxu0
      %v2039 = vadd.f32 %v1937, %v2038
      %2040 = vmatmul.bf16.gmra.mxu0 %v1910
      %v2041 = vpop.f32.mrf.mxu0
      %v2042 = vadd.f32 %v1937, %v2041
      %v2043 = vpop.f32.mrf.mxu0
      %v2044 = vadd.f32 %v1937, %v2043
      %2045 = vmatmul.bf16.gmra.mxu0 %v1911
      %v2046 = vpop.f32.mrf.mxu0
      %v2047 = vadd.f32 %v1937, %v2046
      %v2048 = vpop.f32.mrf.mxu0
      %v2049 = vadd.f32 %v1937, %v2048
      %2050 = vmatmul.bf16.gmra.mxu0 %v1912
      %v2051 = vpop.f32.mrf.mxu0
      %v2052 = vadd.f32 %v1937, %v2051
      %v2053 = vpop.f32.mrf.mxu0
      %v2054 = vadd.f32 %v1937, %v2053
      %2055 = vmatmul.bf16.gmra.mxu0 %v1913
      %v2056 = vpop.f32.mrf.mxu0
      %v2057 = vadd.f32 %v1937, %v2056
      %v2058 = vpop.f32.mrf.mxu0
      %v2059 = vadd.f32 %v1937, %v2058
      %2060 = vmatmul.bf16.gmra.mxu0 %v1914
      %v2061 = vpop.f32.mrf.mxu0
      %v2062 = vadd.f32 %v1937, %v2061
      %v2063 = vpop.f32.mrf.mxu0
      %v2064 = vadd.f32 %v1937, %v2063
      %2065 = vmatmul.bf16.gmra.mxu0 %v1915
      %v2066 = vpop.f32.mrf.mxu0
      %v2067 = vadd.f32 %v1937, %v2066
      %v2068 = vpop.f32.mrf.mxu0
      %v2069 = vadd.f32 %v1937, %v2068
      %2070 = vmatmul.bf16.gmra.mxu0 %v1916
      %v2071 = vpop.f32.mrf.mxu0
      %v2072 = vadd.f32 %v1937, %v2071
      %v2073 = vpop.f32.mrf.mxu0
      %v2074 = vadd.f32 %v1937, %v2073
      %2075 = vdwg.mxu0
      %vm2076 = vcmask 23552
      %2077 = vst.msk [vmem:[%s199] sm:$0xff] %vm2076, %v1997
      %2078 = vst.msk [vmem:[%s199 + $0x8] sm:$0xff] %vm2076, %v1999
      %2079 = vst.msk [vmem:[%s199 + $0x10] sm:$0xff] %vm2076, %v2002
      %2080 = vst.msk [vmem:[%s199 + $0x18] sm:$0xff] %vm2076, %v2004
      %2081 = vst.msk [vmem:[%s199 + $0x20] sm:$0xff] %vm2076, %v2007
      %2082 = vst.msk [vmem:[%s199 + $0x28] sm:$0xff] %vm2076, %v2009
      %2083 = vst.msk [vmem:[%s199 + $0x30] sm:$0xff] %vm2076, %v2012
      %2084 = vst.msk [vmem:[%s199 + $0x38] sm:$0xff] %vm2076, %v2014
      %2085 = vst.msk [vmem:[%s199 + $0x40] sm:$0xff] %vm2076, %v2017
      %2086 = vst.msk [vmem:[%s199 + $0x48] sm:$0xff] %vm2076, %v2019
      %2087 = vst.msk [vmem:[%s199 + $0x50] sm:$0xff] %vm2076, %v2022
      %2088 = vst.msk [vmem:[%s199 + $0x58] sm:$0xff] %vm2076, %v2024
      %2089 = vst.msk [vmem:[%s199 + $0x60] sm:$0xff] %vm2076, %v2027
      %2090 = vst.msk [vmem:[%s199 + $0x68] sm:$0xff] %vm2076, %v2029
      %2091 = vst.msk [vmem:[%s199 + $0x70] sm:$0xff] %vm2076, %v2032
      %2092 = vst.msk [vmem:[%s199 + $0x78] sm:$0xff] %vm2076, %v2034
      %2093 = vst.msk [vmem:[%s199 + $0x80] sm:$0xff] %vm2076, %v2037
      %2094 = vst.msk [vmem:[%s199 + $0x88] sm:$0xff] %vm2076, %v2039
      %2095 = vst.msk [vmem:[%s199 + $0x90] sm:$0xff] %vm2076, %v2042
      %2096 = vst.msk [vmem:[%s199 + $0x98] sm:$0xff] %vm2076, %v2044
      %2097 = vst.msk [vmem:[%s199 + $0xa0] sm:$0xff] %vm2076, %v2047
      %2098 = vst.msk [vmem:[%s199 + $0xa8] sm:$0xff] %vm2076, %v2049
      %2099 = vst.msk [vmem:[%s199 + $0xb0] sm:$0xff] %vm2076, %v2052
      %2100 = vst.msk [vmem:[%s199 + $0xb8] sm:$0xff] %vm2076, %v2054
      %2101 = vst.msk [vmem:[%s199 + $0xc0] sm:$0xff] %vm2076, %v2057
      %2102 = vst.msk [vmem:[%s199 + $0xc8] sm:$0xff] %vm2076, %v2059
      %2103 = vst.msk [vmem:[%s199 + $0xd0] sm:$0xff] %vm2076, %v2062
      %2104 = vst.msk [vmem:[%s199 + $0xd8] sm:$0xff] %vm2076, %v2064
      %2105 = vst.msk [vmem:[%s199 + $0xe0] sm:$0xff] %vm2076, %v2067
      %2106 = vst.msk [vmem:[%s199 + $0xe8] sm:$0xff] %vm2076, %v2069
      %2107 = vst.msk [vmem:[%s199 + $0xf0] sm:$0xff] %vm2076, %v2072
      %2108 = vst.msk [vmem:[%s199 + $0xf8] sm:$0xff] %vm2076, %v2074
      %s2109 = smul.u32 32, %s15
      %p2110 = scmp.lt.s32.totalorder %s2109, 63
      %s2111 = scalar_select %p2110, %s2109, 63
      %s2112 = smul.addr %s2111, 8
      %s2113 = scalar_lea.vmem %s4, %s2112
      // Predicated region
      $region37: #{fully_connected2_forward.1} parent=35 // pred_check
        %p2114 = pneg %p122
      $region38: #{fully_connected2_forward.1} parent=35 // pred_check_branch
        %2116 = sbr.rel (%p2114) target = $region40
      $region39: #{fully_connected2_forward.1} parent=35 // pred_region
        %s2117 = smul.u32 32, %s15
      $region40: #{fully_connected2_forward.1} parent=35 // pred_fallthru
        _
    $region36: #{fully_connected2_forward.1} parent=5 // pred_fallthru
      _
    %p2118 = scmp.le.s32.totalorder 2, %s10
    // Predicated region
    $region41: #{fully_connected2_forward.1} parent=5 // pred_check
      %p2119 = pneg %p2118
    $region42: #{fully_connected2_forward.1} parent=5 // pred_check_branch
      %2121 = sbr.rel (%p2119) target = $region44
    $region43: #{fully_connected2_forward.1} parent=5 // pred_region
      %s2122 = ssub.s32 %s10, 2
      // Predicated region
      $region45: #{fully_connected2_forward.1} parent=43 // pred_check
        %p2123 = pneg %p128
      $region46: #{fully_connected2_forward.1} parent=43 // pred_check_branch
        %2125 = sbr.rel (%p2123) target = $region48
      $region47: #{fully_connected2_forward.1} parent=43 // pred_region
        %s2126 = smul.u32 32, %s16
        %p2127 = scmp.lt.s32.totalorder %s2126, 63
        %s2128 = scalar_select %p2127, %s2126, 63
        %s2129 = smul.addr %s2128, 8
        %s2130 = scalar_lea.vmem %s4, %s2129
      $region48: #{fully_connected2_forward.1} parent=43 // pred_fallthru
        _
    $region44: #{fully_connected2_forward.1} parent=5 // pred_fallthru
      _
  $region6: #{fully_connected2_forward.1} parent=0 // loop_footer
    %s14 = sadd.s32 1, %s10
  $region7: #{fully_connected2_forward.1} parent=0 // loop_footer_branch
    %9 = sbr.rel target = $region3
  $region8: #{fully_connected2_forward.1} parent=0 // loop_exit
    _

</llo_original>
